<compile_context>
chip_gen: v6e
topology: v6e:2x2x1
jax: 0.10.0
libtpu: 0.0.40
codegen_flags: <defaults>
</compile_context>

<pallas_src>
import functools
import math

import jax
import jax.numpy as jnp
from jax import lax
from jax.experimental import pallas as pl
from jax.experimental.pallas import tpu as pltpu


def _round_up(x, m):
    return (x + m - 1) // m * m


# Taylor coefficients in r (r in [-0.5, 0.5)) for sin(pi*r) (odd series, factor
# r pulled out) and cos(pi*r) (even series); abs error < 6e-8 over the range.
# Then sin(2*pi*r) = 2*sh*ch and cos(2*pi*r) = 1 - 2*sh*sh (half-angle form).
_SIN_C = (3.141592653589793, -5.16771278004997, 2.5501640398773455,
          -0.5992645293207921, 0.08214588661112823, -0.007370430945714347)
_COS_C = (1.0, -4.934802200544679, 4.058712126416768, -1.3352627688545893,
          0.23533063035889312, -0.025806891390014, 0.0019295743094039)


def _poly(r2, coeffs):
    acc = coeffs[-1]
    for c in coeffs[-2::-1]:
        acc = acc * r2 + c
    return acc


def _sawtooth_kernel(ph_ref, *rest, num_harmonics, chunk, has_base, has_init):
    """One (BR, TT) tile; independent of every other tile (no carried state)."""
    i = 0
    base_ref = None
    sphi = cphi = None
    if has_base:
        base_ref = rest[i]
        i += 1
    if has_init:
        sphi = rest[i][...]          # (BR, K) sin(2*pi*init_k), resident
        cphi = rest[i + 1][...]      # (BR, K) cos(2*pi*init_k), resident
        i += 2
    tri_ref, out_ref = rest[i], rest[i + 1]

    tt = ph_ref.shape[-1]
    n_chunks = tt // chunk
    carry = None                     # running in-tile cumsum, (BR,1), mod-1 reduced

    for c in range(n_chunks):
        sl = slice(c * chunk, (c + 1) * chunk)
        ph = ph_ref[:, sl]           # (BR, chunk) instantaneous phase increment

        # In-chunk inclusive prefix sum on the MXU against the resident
        # (chunk, chunk) upper-triangular ones matrix. HIGHEST keeps the cumsum
        # at ~f32 accuracy; with chunk=128 this matmul is tiny on every chip.
        cs = jnp.dot(ph, tri_ref[...], preferred_element_type=jnp.float32,
                     precision=lax.Precision.HIGHEST)

        base = cs if carry is None else carry + cs
        if has_base:
            base = base + base_ref[:, sl]   # tile start phase + (offset % 1)

        # Inter-chunk carry from the cumsum's own last column; keep it mod-1
        # reduced so f32 precision holds for long tiles.
        nxt = cs[:, chunk - 1:chunk] if carry is None \
            else carry + cs[:, chunk - 1:chunk]
        carry = nxt - jnp.floor(nxt)

        # sin/cos(2*pi*base): reduce to r in [-0.5, 0.5) and evaluate short
        # even/odd polynomials (half-angle) — ~16 VPU ops for the pair.
        r = base - jnp.floor(base + 0.5)
        r2 = r * r
        sh = r * _poly(r2, _SIN_C)           # sin(pi*r)
        ch = _poly(r2, _COS_C)               # cos(pi*r)
        s1 = 2.0 * sh * ch                   # sin(2*pi*base)
        c1 = 1.0 - 2.0 * sh * sh             # cos(2*pi*base)

        # Harmonic bank: sin(k*theta + phi_k) by the angle-addition recurrence;
        # per-harmonic work is pure VPU FMAs. Alias mask uses the compile-time
        # threshold 0.5/k (no per-harmonic multiply of ph).
        sig = jnp.zeros_like(ph)
        s_k, c_k = s1, c1
        for k in range(1, num_harmonics + 1):
            amp = jnp.where(ph >= 0.5 / k, 0.0, 1.0 / k)
            if has_init:
                term = s_k * cphi[:, k - 1:k] + c_k * sphi[:, k - 1:k]
            else:
                term = s_k
            sig = sig + term * amp
            if k < num_harmonics:
                s_k, c_k = s_k * c1 + c_k * s1, c_k * c1 - s_k * s1

        out_ref[:, sl] = sig.astype(out_ref.dtype)


def sawtooth_oscillator(upsampled_phase, num_harmonics, *, gain=0.4,
                        initial_phase=None, upsampled_phase_offset=None,
                        time_tile=2048, batch_tile=32):
    """JAX/Pallas equivalent of SawToothOscillator(num_harmonics, gain).forward."""
    del gain  # stored by the torch module but never used in forward
    assert upsampled_phase.ndim == 2, upsampled_phase.shape
    K = int(num_harmonics)
    assert K >= 1
    B, T = upsampled_phase.shape

    CW = 128  # prefix-sum matmul chunk width (matches v5e MXU tile; tri = 64 KiB)
    x = upsampled_phase.astype(jnp.float32)

    # Time tiling: large tiles to amortize per-grid-step overhead, sized so
    # padding is at most CW-1 lanes per tile.
    Tp128 = _round_up(T, CW)
    tt_max = max(CW, min(_round_up(time_tile, CW), Tp128))
    n_t = -(-Tp128 // tt_max)
    TT = _round_up(-(-Tp128 // n_t), CW)
    Tp = TT * n_t

    # Batch tiling: 8-row minimum (sublane alignment); grow when B allows.
    Bp = _round_up(B, 8)
    BR = 8
    for cand in (batch_tile, 16):
        if cand > BR and cand % 8 == 0 and Bp % cand == 0:
            BR = cand
            break

    if (Bp, Tp) != (B, T):
        x = jnp.pad(x, ((0, Bp - B), (0, Tp - T)))

    # Two-pass phase: exclusive per-tile starting phase (carried mod 1 — whole
    # cycles are irrelevant for every harmonic) so each time tile is independent.
    has_base = (upsampled_phase_offset is not None) or (n_t > 1)
    base_add = None
    if n_t > 1:
        tile_sums = x.reshape(Bp, n_t, TT).sum(axis=-1)           # (Bp, n_t)

        def _scan(carry, s):
            nxt = carry + s
            return nxt - jnp.floor(nxt), carry                    # exclusive, mod 1

        _, tile_base = lax.scan(_scan, jnp.zeros((Bp,), jnp.float32),
                                jnp.swapaxes(tile_sums, 0, 1))
        tile_base = jnp.swapaxes(tile_base, 0, 1)                 # (Bp, n_t)
        base_add = jnp.repeat(tile_base, TT, axis=1)              # (Bp, Tp)
    if upsampled_phase_offset is not None:
        off = upsampled_phase_offset.astype(jnp.float32) % 1.0
        off = jnp.pad(off, ((0, Bp - B), (0, Tp - T)))
        base_add = off if base_add is None else base_add + off

    has_init = initial_phase is not None
    if has_init:
        init = initial_phase.astype(jnp.float32)
        init = jnp.pad(init, ((0, Bp - B), (0, 0)))
        phi = (init - jnp.floor(init)) * (2.0 * math.pi)
        sphi = jnp.sin(phi)
        cphi = jnp.cos(phi)

    # Resident (CW, CW) upper-triangular ones matrix: cumsum(chunk) = chunk @ tri.
    tri = (jnp.arange(CW)[:, None] <= jnp.arange(CW)[None, :]).astype(jnp.float32)

    tile_spec = pl.BlockSpec((BR, TT), lambda bg, tg: (bg, tg))
    in_specs = [tile_spec]
    args = [x]
    if has_base:
        in_specs.append(tile_spec)
        args.append(base_add)
    if has_init:
        kh_spec = pl.BlockSpec((BR, K), lambda bg, tg: (bg, 0))   # resident
        in_specs += [kh_spec, kh_spec]
        args += [sphi, cphi]
    in_specs.append(pl.BlockSpec((CW, CW), lambda bg, tg: (0, 0)))  # tri, resident
    args.append(tri)

    kernel = functools.partial(_sawtooth_kernel, num_harmonics=K, chunk=CW,
                               has_base=has_base, has_init=has_init)

    out = pl.pallas_call(
        kernel,
        out_shape=jax.ShapeDtypeStruct((Bp, Tp), jnp.float32),
        grid_spec=pltpu.PrefetchScalarGridSpec(
            num_scalar_prefetch=0,
            grid=(Bp // BR, n_t),
            in_specs=in_specs,
            out_specs=tile_spec,
        ),
        compiler_params=pltpu.CompilerParams(
            dimension_semantics=("parallel", "parallel"),
            vmem_limit_bytes=32 * 1024 * 1024,
        ),
    )(*args)
    return out[:B, :T]


def _reference(phase, K, initial_phase=None, offset=None):
    """Pure-JAX transcription of the PyTorch forward (correctness check)."""
    k = jnp.arange(1, K + 1, dtype=jnp.float32)
    harmonics = phase[..., None] * k                 # B x T x K
    alias = harmonics >= 0.5
    ph = jnp.cumsum(harmonics, axis=1)
    if offset is not None:
        ph = ph + (offset % 1.0)[..., None] * k
    if initial_phase is not None:
        ph = ph + initial_phase[:, None, :]
    amps = jnp.where(alias, 0.0, 1.0 / k)
    return jnp.sum(jnp.sin(ph * 2.0 * jnp.pi) * amps, axis=-1)


if __name__ == "__main__":
    key = jax.random.PRNGKey(0)
    k1, k2, k3, k4 = jax.random.split(key, 4)

    # Case 1: offsets + initial phase, single time tile.
    B, T, K = 2, 256, 8
    upsampled_phase = jax.random.uniform(k1, (B, T), jnp.float32, 0.0, 0.5)
    initial_phase = jax.random.uniform(k2, (B, K), jnp.float32)
    upsampled_phase_offset = jax.random.uniform(k3, (B, T), jnp.float32, 0.0, 2.0)

    out = sawtooth_oscillator(
        upsampled_phase, K,
        initial_phase=initial_phase,
        upsampled_phase_offset=upsampled_phase_offset,
    )
    out = jax.block_until_ready(out)
    ref = _reference(upsampled_phase, K, initial_phase, upsampled_phase_offset)
    assert out.shape == (B, T) and out.dtype == jnp.float32
    err1 = float(jnp.max(jnp.abs(out - ref)))
    assert err1 < 5e-2, err1

    # Case 2: no offset / no initial phase, multiple time tiles + padding.
    B2, T2, K2 = 3, 640, 5
    phase2 = jax.random.uniform(k4, (B2, T2), jnp.float32, 0.0, 0.5)
    out2 = sawtooth_oscillator(phase2, K2, time_tile=256)
    out2 = jax.block_until_ready(out2)
    ref2 = _reference(phase2, K2)
    assert out2.shape == (B2, T2)
    err2 = float(jnp.max(jnp.abs(out2 - ref2)))
    assert err2 < 5e-2, err2

    print("KERNEL_OK")
</pallas_src>

<mosaic_0001>
module attributes {stable_mosaic.version = 11 : i64} {
  func.func @_sawtooth_kernel(%arg0: i32, %arg1: i32, %arg2: memref<8x256xf32, #tpu.memory_space<vmem>>, %arg3: memref<8x256xf32, #tpu.memory_space<vmem>>, %arg4: memref<8x8xf32, #tpu.memory_space<vmem>>, %arg5: memref<8x8xf32, #tpu.memory_space<vmem>>, %arg6: memref<128x128xf32, #tpu.memory_space<vmem>>, %arg7: memref<8x256xf32, #tpu.memory_space<vmem>>) attributes {dimension_semantics = [#tpu.dimension_semantics<parallel>, #tpu.dimension_semantics<parallel>], iteration_bounds = array<i64: 1, 1>, scalar_prefetch = 0 : i64, scratch_operands = 0 : i64, tpu.core_type = #tpu.core_type<tc>, window_params = [{transform_indices = @transform_0, window_bounds = array<i64: 8, 256>}, {transform_indices = @transform_1, window_bounds = array<i64: 8, 256>}, {transform_indices = @transform_2, window_bounds = array<i64: 8, 8>}, {transform_indices = @transform_3, window_bounds = array<i64: 8, 8>}, {pipeline_mode = #tpu.pipeline_mode<synchronous>, transform_indices = @transform_4, window_bounds = array<i64: 128, 128>}, {transform_indices = @transform_5, window_bounds = array<i64: 8, 256>}]} {
    %c0 = arith.constant 0 : index
    %c0_0 = arith.constant 0 : index
    %0 = vector.load %arg4[%c0, %c0_0] : memref<8x8xf32, #tpu.memory_space<vmem>>, vector<8x8xf32>
    %c0_1 = arith.constant 0 : index
    %c0_2 = arith.constant 0 : index
    %1 = vector.load %arg5[%c0_1, %c0_2] : memref<8x8xf32, #tpu.memory_space<vmem>>, vector<8x8xf32>
    %c0_3 = arith.constant 0 : index
    %c0_4 = arith.constant 0 : index
    %2 = vector.load %arg2[%c0_3, %c0_4] : memref<8x256xf32, #tpu.memory_space<vmem>>, vector<8x128xf32>
    %c0_5 = arith.constant 0 : index
    %c0_6 = arith.constant 0 : index
    %3 = vector.load %arg6[%c0_5, %c0_6] : memref<128x128xf32, #tpu.memory_space<vmem>>, vector<128x128xf32>
    %cst = arith.constant dense<0.000000e+00> : vector<8x128xf32>
    %4 = tpu.matmul %2, %3, %cst {dimension_numbers = #tpu.dot_dimension_numbers<[1], [0], [0], [1], [0, 0, 1, 1], [], []>, precision = #tpu.contract_precision<fp32>} : vector<8x128xf32>, vector<128x128xf32>, vector<8x128xf32> -> vector<8x128xf32>
    %c0_7 = arith.constant 0 : index
    %c0_8 = arith.constant 0 : index
    %5 = vector.load %arg3[%c0_7, %c0_8] : memref<8x256xf32, #tpu.memory_space<vmem>>, vector<8x128xf32>
    %6 = arith.addf %4, %5 : vector<8x128xf32>
    %7 = vector.extract_strided_slice %4 {offsets = [0, 127], sizes = [8, 1], strides = [1, 1]} : vector<8x128xf32> to vector<8x1xf32>
    %8 = math.floor %7 : vector<8x1xf32>
    %9 = arith.subf %7, %8 : vector<8x1xf32>
    %cst_9 = arith.constant 5.000000e-01 : f32
    %10 = vector.broadcast %cst_9 : f32 to vector<8x128xf32>
    %11 = arith.addf %6, %10 : vector<8x128xf32>
    %12 = math.floor %11 : vector<8x128xf32>
    %13 = arith.subf %6, %12 : vector<8x128xf32>
    %14 = arith.mulf %13, %13 : vector<8x128xf32>
    %cst_10 = arith.constant -0.00737043098 : f32
    %15 = vector.broadcast %cst_10 : f32 to vector<8x128xf32>
    %16 = arith.mulf %15, %14 : vector<8x128xf32>
    %cst_11 = arith.constant 0.0821458846 : f32
    %17 = vector.broadcast %cst_11 : f32 to vector<8x128xf32>
    %18 = arith.addf %16, %17 : vector<8x128xf32>
    %19 = arith.mulf %18, %14 : vector<8x128xf32>
    %cst_12 = arith.constant -0.599264503 : f32
    %20 = vector.broadcast %cst_12 : f32 to vector<8x128xf32>
    %21 = arith.addf %19, %20 : vector<8x128xf32>
    %22 = arith.mulf %21, %14 : vector<8x128xf32>
    %cst_13 = arith.constant 2.55016398 : f32
    %23 = vector.broadcast %cst_13 : f32 to vector<8x128xf32>
    %24 = arith.addf %22, %23 : vector<8x128xf32>
    %25 = arith.mulf %24, %14 : vector<8x128xf32>
    %cst_14 = arith.constant -5.16771269 : f32
    %26 = vector.broadcast %cst_14 : f32 to vector<8x128xf32>
    %27 = arith.addf %25, %26 : vector<8x128xf32>
    %28 = arith.mulf %27, %14 : vector<8x128xf32>
    %cst_15 = arith.constant 3.14159274 : f32
    %29 = vector.broadcast %cst_15 : f32 to vector<8x128xf32>
    %30 = arith.addf %28, %29 : vector<8x128xf32>
    %31 = arith.mulf %13, %30 : vector<8x128xf32>
    %cst_16 = arith.constant 0.0019295743 : f32
    %32 = vector.broadcast %cst_16 : f32 to vector<8x128xf32>
    %33 = arith.mulf %32, %14 : vector<8x128xf32>
    %cst_17 = arith.constant -0.0258068908 : f32
    %34 = vector.broadcast %cst_17 : f32 to vector<8x128xf32>
    %35 = arith.addf %33, %34 : vector<8x128xf32>
    %36 = arith.mulf %35, %14 : vector<8x128xf32>
    %cst_18 = arith.constant 0.235330626 : f32
    %37 = vector.broadcast %cst_18 : f32 to vector<8x128xf32>
    %38 = arith.addf %36, %37 : vector<8x128xf32>
    %39 = arith.mulf %38, %14 : vector<8x128xf32>
    %cst_19 = arith.constant -1.33526278 : f32
    %40 = vector.broadcast %cst_19 : f32 to vector<8x128xf32>
    %41 = arith.addf %39, %40 : vector<8x128xf32>
    %42 = arith.mulf %41, %14 : vector<8x128xf32>
    %cst_20 = arith.constant 4.05871201 : f32
    %43 = vector.broadcast %cst_20 : f32 to vector<8x128xf32>
    %44 = arith.addf %42, %43 : vector<8x128xf32>
    %45 = arith.mulf %44, %14 : vector<8x128xf32>
    %cst_21 = arith.constant -4.93480206 : f32
    %46 = vector.broadcast %cst_21 : f32 to vector<8x128xf32>
    %47 = arith.addf %45, %46 : vector<8x128xf32>
    %48 = arith.mulf %47, %14 : vector<8x128xf32>
    %cst_22 = arith.constant 1.000000e+00 : f32
    %49 = vector.broadcast %cst_22 : f32 to vector<8x128xf32>
    %50 = arith.addf %48, %49 : vector<8x128xf32>
    %cst_23 = arith.constant 2.000000e+00 : f32
    %51 = vector.broadcast %cst_23 : f32 to vector<8x128xf32>
    %52 = arith.mulf %51, %31 : vector<8x128xf32>
    %53 = arith.mulf %52, %50 : vector<8x128xf32>
    %cst_24 = arith.constant 2.000000e+00 : f32
    %54 = vector.broadcast %cst_24 : f32 to vector<8x128xf32>
    %55 = arith.mulf %54, %31 : vector<8x128xf32>
    %56 = arith.mulf %55, %31 : vector<8x128xf32>
    %cst_25 = arith.constant 1.000000e+00 : f32
    %57 = vector.broadcast %cst_25 : f32 to vector<8x128xf32>
    %58 = arith.subf %57, %56 : vector<8x128xf32>
    %cst_26 = arith.constant 0.000000e+00 : f32
    %59 = vector.broadcast %cst_26 : f32 to vector<8x128xf32>
    %cst_27 = arith.constant 5.000000e-01 : f32
    %60 = vector.broadcast %cst_27 : f32 to vector<8x128xf32>
    %61 = arith.cmpf oge, %2, %60 : vector<8x128xf32>
    %cst_28 = arith.constant 0.000000e+00 : f32
    %cst_29 = arith.constant 1.000000e+00 : f32
    %62 = vector.broadcast %cst_28 : f32 to vector<8x128xf32>
    %63 = vector.broadcast %cst_29 : f32 to vector<8x128xf32>
    %64 = arith.select %61, %62, %63 : vector<8x128xi1>, vector<8x128xf32>
    %65 = vector.extract_strided_slice %1 {offsets = [0, 0], sizes = [8, 1], strides = [1, 1]} : vector<8x8xf32> to vector<8x1xf32>
    %66 = vector.broadcast %65 : vector<8x1xf32> to vector<8x128xf32>
    %67 = arith.mulf %53, %66 : vector<8x128xf32>
    %68 = vector.extract_strided_slice %0 {offsets = [0, 0], sizes = [8, 1], strides = [1, 1]} : vector<8x8xf32> to vector<8x1xf32>
    %69 = vector.broadcast %68 : vector<8x1xf32> to vector<8x128xf32>
    %70 = arith.mulf %58, %69 : vector<8x128xf32>
    %71 = arith.addf %67, %70 : vector<8x128xf32>
    %72 = arith.mulf %71, %64 : vector<8x128xf32>
    %73 = arith.addf %59, %72 : vector<8x128xf32>
    %74 = arith.mulf %53, %58 : vector<8x128xf32>
    %75 = arith.mulf %58, %53 : vector<8x128xf32>
    %76 = arith.addf %74, %75 : vector<8x128xf32>
    %77 = arith.mulf %58, %58 : vector<8x128xf32>
    %78 = arith.mulf %53, %53 : vector<8x128xf32>
    %79 = arith.subf %77, %78 : vector<8x128xf32>
    %cst_30 = arith.constant 2.500000e-01 : f32
    %80 = vector.broadcast %cst_30 : f32 to vector<8x128xf32>
    %81 = arith.cmpf oge, %2, %80 : vector<8x128xf32>
    %cst_31 = arith.constant 0.000000e+00 : f32
    %cst_32 = arith.constant 5.000000e-01 : f32
    %82 = vector.broadcast %cst_31 : f32 to vector<8x128xf32>
    %83 = vector.broadcast %cst_32 : f32 to vector<8x128xf32>
    %84 = arith.select %81, %82, %83 : vector<8x128xi1>, vector<8x128xf32>
    %85 = vector.extract_strided_slice %1 {offsets = [0, 1], sizes = [8, 1], strides = [1, 1]} : vector<8x8xf32> to vector<8x1xf32>
    %86 = vector.broadcast %85 : vector<8x1xf32> to vector<8x128xf32>
    %87 = arith.mulf %76, %86 : vector<8x128xf32>
    %88 = vector.extract_strided_slice %0 {offsets = [0, 1], sizes = [8, 1], strides = [1, 1]} : vector<8x8xf32> to vector<8x1xf32>
    %89 = vector.broadcast %88 : vector<8x1xf32> to vector<8x128xf32>
    %90 = arith.mulf %79, %89 : vector<8x128xf32>
    %91 = arith.addf %87, %90 : vector<8x128xf32>
    %92 = arith.mulf %91, %84 : vector<8x128xf32>
    %93 = arith.addf %73, %92 : vector<8x128xf32>
    %94 = arith.mulf %76, %58 : vector<8x128xf32>
    %95 = arith.mulf %79, %53 : vector<8x128xf32>
    %96 = arith.addf %94, %95 : vector<8x128xf32>
    %97 = arith.mulf %79, %58 : vector<8x128xf32>
    %98 = arith.mulf %76, %53 : vector<8x128xf32>
    %99 = arith.subf %97, %98 : vector<8x128xf32>
    %cst_33 = arith.constant 0.166666672 : f32
    %100 = vector.broadcast %cst_33 : f32 to vector<8x128xf32>
    %101 = arith.cmpf oge, %2, %100 : vector<8x128xf32>
    %cst_34 = arith.constant 0.000000e+00 : f32
    %cst_35 = arith.constant 0.333333343 : f32
    %102 = vector.broadcast %cst_34 : f32 to vector<8x128xf32>
    %103 = vector.broadcast %cst_35 : f32 to vector<8x128xf32>
    %104 = arith.select %101, %102, %103 : vector<8x128xi1>, vector<8x128xf32>
    %105 = vector.extract_strided_slice %1 {offsets = [0, 2], sizes = [8, 1], strides = [1, 1]} : vector<8x8xf32> to vector<8x1xf32>
    %106 = vector.broadcast %105 : vector<8x1xf32> to vector<8x128xf32>
    %107 = arith.mulf %96, %106 : vector<8x128xf32>
    %108 = vector.extract_strided_slice %0 {offsets = [0, 2], sizes = [8, 1], strides = [1, 1]} : vector<8x8xf32> to vector<8x1xf32>
    %109 = vector.broadcast %108 : vector<8x1xf32> to vector<8x128xf32>
    %110 = arith.mulf %99, %109 : vector<8x128xf32>
    %111 = arith.addf %107, %110 : vector<8x128xf32>
    %112 = arith.mulf %111, %104 : vector<8x128xf32>
    %113 = arith.addf %93, %112 : vector<8x128xf32>
    %114 = arith.mulf %96, %58 : vector<8x128xf32>
    %115 = arith.mulf %99, %53 : vector<8x128xf32>
    %116 = arith.addf %114, %115 : vector<8x128xf32>
    %117 = arith.mulf %99, %58 : vector<8x128xf32>
    %118 = arith.mulf %96, %53 : vector<8x128xf32>
    %119 = arith.subf %117, %118 : vector<8x128xf32>
    %cst_36 = arith.constant 1.250000e-01 : f32
    %120 = vector.broadcast %cst_36 : f32 to vector<8x128xf32>
    %121 = arith.cmpf oge, %2, %120 : vector<8x128xf32>
    %cst_37 = arith.constant 0.000000e+00 : f32
    %cst_38 = arith.constant 2.500000e-01 : f32
    %122 = vector.broadcast %cst_37 : f32 to vector<8x128xf32>
    %123 = vector.broadcast %cst_38 : f32 to vector<8x128xf32>
    %124 = arith.select %121, %122, %123 : vector<8x128xi1>, vector<8x128xf32>
    %125 = vector.extract_strided_slice %1 {offsets = [0, 3], sizes = [8, 1], strides = [1, 1]} : vector<8x8xf32> to vector<8x1xf32>
    %126 = vector.broadcast %125 : vector<8x1xf32> to vector<8x128xf32>
    %127 = arith.mulf %116, %126 : vector<8x128xf32>
    %128 = vector.extract_strided_slice %0 {offsets = [0, 3], sizes = [8, 1], strides = [1, 1]} : vector<8x8xf32> to vector<8x1xf32>
    %129 = vector.broadcast %128 : vector<8x1xf32> to vector<8x128xf32>
    %130 = arith.mulf %119, %129 : vector<8x128xf32>
    %131 = arith.addf %127, %130 : vector<8x128xf32>
    %132 = arith.mulf %131, %124 : vector<8x128xf32>
    %133 = arith.addf %113, %132 : vector<8x128xf32>
    %134 = arith.mulf %116, %58 : vector<8x128xf32>
    %135 = arith.mulf %119, %53 : vector<8x128xf32>
    %136 = arith.addf %134, %135 : vector<8x128xf32>
    %137 = arith.mulf %119, %58 : vector<8x128xf32>
    %138 = arith.mulf %116, %53 : vector<8x128xf32>
    %139 = arith.subf %137, %138 : vector<8x128xf32>
    %cst_39 = arith.constant 1.000000e-01 : f32
    %140 = vector.broadcast %cst_39 : f32 to vector<8x128xf32>
    %141 = arith.cmpf oge, %2, %140 : vector<8x128xf32>
    %cst_40 = arith.constant 0.000000e+00 : f32
    %cst_41 = arith.constant 2.000000e-01 : f32
    %142 = vector.broadcast %cst_40 : f32 to vector<8x128xf32>
    %143 = vector.broadcast %cst_41 : f32 to vector<8x128xf32>
    %144 = arith.select %141, %142, %143 : vector<8x128xi1>, vector<8x128xf32>
    %145 = vector.extract_strided_slice %1 {offsets = [0, 4], sizes = [8, 1], strides = [1, 1]} : vector<8x8xf32> to vector<8x1xf32>
    %146 = vector.broadcast %145 : vector<8x1xf32> to vector<8x128xf32>
    %147 = arith.mulf %136, %146 : vector<8x128xf32>
    %148 = vector.extract_strided_slice %0 {offsets = [0, 4], sizes = [8, 1], strides = [1, 1]} : vector<8x8xf32> to vector<8x1xf32>
    %149 = vector.broadcast %148 : vector<8x1xf32> to vector<8x128xf32>
    %150 = arith.mulf %139, %149 : vector<8x128xf32>
    %151 = arith.addf %147, %150 : vector<8x128xf32>
    %152 = arith.mulf %151, %144 : vector<8x128xf32>
    %153 = arith.addf %133, %152 : vector<8x128xf32>
    %154 = arith.mulf %136, %58 : vector<8x128xf32>
    %155 = arith.mulf %139, %53 : vector<8x128xf32>
    %156 = arith.addf %154, %155 : vector<8x128xf32>
    %157 = arith.mulf %139, %58 : vector<8x128xf32>
    %158 = arith.mulf %136, %53 : vector<8x128xf32>
    %159 = arith.subf %157, %158 : vector<8x128xf32>
    %cst_42 = arith.constant 0.0833333358 : f32
    %160 = vector.broadcast %cst_42 : f32 to vector<8x128xf32>
    %161 = arith.cmpf oge, %2, %160 : vector<8x128xf32>
    %cst_43 = arith.constant 0.000000e+00 : f32
    %cst_44 = arith.constant 0.166666672 : f32
    %162 = vector.broadcast %cst_43 : f32 to vector<8x128xf32>
    %163 = vector.broadcast %cst_44 : f32 to vector<8x128xf32>
    %164 = arith.select %161, %162, %163 : vector<8x128xi1>, vector<8x128xf32>
    %165 = vector.extract_strided_slice %1 {offsets = [0, 5], sizes = [8, 1], strides = [1, 1]} : vector<8x8xf32> to vector<8x1xf32>
    %166 = vector.broadcast %165 : vector<8x1xf32> to vector<8x128xf32>
    %167 = arith.mulf %156, %166 : vector<8x128xf32>
    %168 = vector.extract_strided_slice %0 {offsets = [0, 5], sizes = [8, 1], strides = [1, 1]} : vector<8x8xf32> to vector<8x1xf32>
    %169 = vector.broadcast %168 : vector<8x1xf32> to vector<8x128xf32>
    %170 = arith.mulf %159, %169 : vector<8x128xf32>
    %171 = arith.addf %167, %170 : vector<8x128xf32>
    %172 = arith.mulf %171, %164 : vector<8x128xf32>
    %173 = arith.addf %153, %172 : vector<8x128xf32>
    %174 = arith.mulf %156, %58 : vector<8x128xf32>
    %175 = arith.mulf %159, %53 : vector<8x128xf32>
    %176 = arith.addf %174, %175 : vector<8x128xf32>
    %177 = arith.mulf %159, %58 : vector<8x128xf32>
    %178 = arith.mulf %156, %53 : vector<8x128xf32>
    %179 = arith.subf %177, %178 : vector<8x128xf32>
    %cst_45 = arith.constant 0.0714285746 : f32
    %180 = vector.broadcast %cst_45 : f32 to vector<8x128xf32>
    %181 = arith.cmpf oge, %2, %180 : vector<8x128xf32>
    %cst_46 = arith.constant 0.000000e+00 : f32
    %cst_47 = arith.constant 0.142857149 : f32
    %182 = vector.broadcast %cst_46 : f32 to vector<8x128xf32>
    %183 = vector.broadcast %cst_47 : f32 to vector<8x128xf32>
    %184 = arith.select %181, %182, %183 : vector<8x128xi1>, vector<8x128xf32>
    %185 = vector.extract_strided_slice %1 {offsets = [0, 6], sizes = [8, 1], strides = [1, 1]} : vector<8x8xf32> to vector<8x1xf32>
    %186 = vector.broadcast %185 : vector<8x1xf32> to vector<8x128xf32>
    %187 = arith.mulf %176, %186 : vector<8x128xf32>
    %188 = vector.extract_strided_slice %0 {offsets = [0, 6], sizes = [8, 1], strides = [1, 1]} : vector<8x8xf32> to vector<8x1xf32>
    %189 = vector.broadcast %188 : vector<8x1xf32> to vector<8x128xf32>
    %190 = arith.mulf %179, %189 : vector<8x128xf32>
    %191 = arith.addf %187, %190 : vector<8x128xf32>
    %192 = arith.mulf %191, %184 : vector<8x128xf32>
    %193 = arith.addf %173, %192 : vector<8x128xf32>
    %194 = arith.mulf %176, %58 : vector<8x128xf32>
    %195 = arith.mulf %179, %53 : vector<8x128xf32>
    %196 = arith.addf %194, %195 : vector<8x128xf32>
    %197 = arith.mulf %179, %58 : vector<8x128xf32>
    %198 = arith.mulf %176, %53 : vector<8x128xf32>
    %199 = arith.subf %197, %198 : vector<8x128xf32>
    %cst_48 = arith.constant 6.250000e-02 : f32
    %200 = vector.broadcast %cst_48 : f32 to vector<8x128xf32>
    %201 = arith.cmpf oge, %2, %200 : vector<8x128xf32>
    %cst_49 = arith.constant 0.000000e+00 : f32
    %cst_50 = arith.constant 1.250000e-01 : f32
    %202 = vector.broadcast %cst_49 : f32 to vector<8x128xf32>
    %203 = vector.broadcast %cst_50 : f32 to vector<8x128xf32>
    %204 = arith.select %201, %202, %203 : vector<8x128xi1>, vector<8x128xf32>
    %205 = vector.extract_strided_slice %1 {offsets = [0, 7], sizes = [8, 1], strides = [1, 1]} : vector<8x8xf32> to vector<8x1xf32>
    %206 = vector.broadcast %205 : vector<8x1xf32> to vector<8x128xf32>
    %207 = arith.mulf %196, %206 : vector<8x128xf32>
    %208 = vector.extract_strided_slice %0 {offsets = [0, 7], sizes = [8, 1], strides = [1, 1]} : vector<8x8xf32> to vector<8x1xf32>
    %209 = vector.broadcast %208 : vector<8x1xf32> to vector<8x128xf32>
    %210 = arith.mulf %199, %209 : vector<8x128xf32>
    %211 = arith.addf %207, %210 : vector<8x128xf32>
    %212 = arith.mulf %211, %204 : vector<8x128xf32>
    %213 = arith.addf %193, %212 : vector<8x128xf32>
    %c0_51 = arith.constant 0 : index
    %c0_52 = arith.constant 0 : index
    %214 = vector.load %arg7[%c0_51, %c0_52] : memref<8x256xf32, #tpu.memory_space<vmem>>, vector<8x128xf32>
    tpu.vector_store %arg7[%c0_51, %c0_52], %213 {strides = array<i32>} : memref<8x256xf32, #tpu.memory_space<vmem>>, vector<8x128xf32>,
    %c0_53 = arith.constant 0 : index
    %c128 = arith.constant 128 : index
    %215 = vector.load %arg2[%c0_53, %c128] : memref<8x256xf32, #tpu.memory_space<vmem>>, vector<8x128xf32>
    %c0_54 = arith.constant 0 : index
    %c0_55 = arith.constant 0 : index
    %216 = vector.load %arg6[%c0_54, %c0_55] : memref<128x128xf32, #tpu.memory_space<vmem>>, vector<128x128xf32>
    %cst_56 = arith.constant dense<0.000000e+00> : vector<8x128xf32>
    %217 = tpu.matmul %215, %216, %cst_56 {dimension_numbers = #tpu.dot_dimension_numbers<[1], [0], [0], [1], [0, 0, 1, 1], [], []>, precision = #tpu.contract_precision<fp32>} : vector<8x128xf32>, vector<128x128xf32>, vector<8x128xf32> -> vector<8x128xf32>
    %218 = vector.broadcast %9 : vector<8x1xf32> to vector<8x128xf32>
    %219 = arith.addf %218, %217 : vector<8x128xf32>
    %c0_57 = arith.constant 0 : index
    %c128_58 = arith.constant 128 : index
    %220 = vector.load %arg3[%c0_57, %c128_58] : memref<8x256xf32, #tpu.memory_space<vmem>>, vector<8x128xf32>
    %221 = arith.addf %219, %220 : vector<8x128xf32>
    %cst_59 = arith.constant 5.000000e-01 : f32
    %222 = vector.broadcast %cst_59 : f32 to vector<8x128xf32>
    %223 = arith.addf %221, %222 : vector<8x128xf32>
    %224 = math.floor %223 : vector<8x128xf32>
    %225 = arith.subf %221, %224 : vector<8x128xf32>
    %226 = arith.mulf %225, %225 : vector<8x128xf32>
    %cst_60 = arith.constant -0.00737043098 : f32
    %227 = vector.broadcast %cst_60 : f32 to vector<8x128xf32>
    %228 = arith.mulf %227, %226 : vector<8x128xf32>
    %cst_61 = arith.constant 0.0821458846 : f32
    %229 = vector.broadcast %cst_61 : f32 to vector<8x128xf32>
    %230 = arith.addf %228, %229 : vector<8x128xf32>
    %231 = arith.mulf %230, %226 : vector<8x128xf32>
    %cst_62 = arith.constant -0.599264503 : f32
    %232 = vector.broadcast %cst_62 : f32 to vector<8x128xf32>
    %233 = arith.addf %231, %232 : vector<8x128xf32>
    %234 = arith.mulf %233, %226 : vector<8x128xf32>
    %cst_63 = arith.constant 2.55016398 : f32
    %235 = vector.broadcast %cst_63 : f32 to vector<8x128xf32>
    %236 = arith.addf %234, %235 : vector<8x128xf32>
    %237 = arith.mulf %236, %226 : vector<8x128xf32>
    %cst_64 = arith.constant -5.16771269 : f32
    %238 = vector.broadcast %cst_64 : f32 to vector<8x128xf32>
    %239 = arith.addf %237, %238 : vector<8x128xf32>
    %240 = arith.mulf %239, %226 : vector<8x128xf32>
    %cst_65 = arith.constant 3.14159274 : f32
    %241 = vector.broadcast %cst_65 : f32 to vector<8x128xf32>
    %242 = arith.addf %240, %241 : vector<8x128xf32>
    %243 = arith.mulf %225, %242 : vector<8x128xf32>
    %cst_66 = arith.constant 0.0019295743 : f32
    %244 = vector.broadcast %cst_66 : f32 to vector<8x128xf32>
    %245 = arith.mulf %244, %226 : vector<8x128xf32>
    %cst_67 = arith.constant -0.0258068908 : f32
    %246 = vector.broadcast %cst_67 : f32 to vector<8x128xf32>
    %247 = arith.addf %245, %246 : vector<8x128xf32>
    %248 = arith.mulf %247, %226 : vector<8x128xf32>
    %cst_68 = arith.constant 0.235330626 : f32
    %249 = vector.broadcast %cst_68 : f32 to vector<8x128xf32>
    %250 = arith.addf %248, %249 : vector<8x128xf32>
    %251 = arith.mulf %250, %226 : vector<8x128xf32>
    %cst_69 = arith.constant -1.33526278 : f32
    %252 = vector.broadcast %cst_69 : f32 to vector<8x128xf32>
    %253 = arith.addf %251, %252 : vector<8x128xf32>
    %254 = arith.mulf %253, %226 : vector<8x128xf32>
    %cst_70 = arith.constant 4.05871201 : f32
    %255 = vector.broadcast %cst_70 : f32 to vector<8x128xf32>
    %256 = arith.addf %254, %255 : vector<8x128xf32>
    %257 = arith.mulf %256, %226 : vector<8x128xf32>
    %cst_71 = arith.constant -4.93480206 : f32
    %258 = vector.broadcast %cst_71 : f32 to vector<8x128xf32>
    %259 = arith.addf %257, %258 : vector<8x128xf32>
    %260 = arith.mulf %259, %226 : vector<8x128xf32>
    %cst_72 = arith.constant 1.000000e+00 : f32
    %261 = vector.broadcast %cst_72 : f32 to vector<8x128xf32>
    %262 = arith.addf %260, %261 : vector<8x128xf32>
    %cst_73 = arith.constant 2.000000e+00 : f32
    %263 = vector.broadcast %cst_73 : f32 to vector<8x128xf32>
    %264 = arith.mulf %263, %243 : vector<8x128xf32>
    %265 = arith.mulf %264, %262 : vector<8x128xf32>
    %cst_74 = arith.constant 2.000000e+00 : f32
    %266 = vector.broadcast %cst_74 : f32 to vector<8x128xf32>
    %267 = arith.mulf %266, %243 : vector<8x128xf32>
    %268 = arith.mulf %267, %243 : vector<8x128xf32>
    %cst_75 = arith.constant 1.000000e+00 : f32
    %269 = vector.broadcast %cst_75 : f32 to vector<8x128xf32>
    %270 = arith.subf %269, %268 : vector<8x128xf32>
    %cst_76 = arith.constant 0.000000e+00 : f32
    %271 = vector.broadcast %cst_76 : f32 to vector<8x128xf32>
    %cst_77 = arith.constant 5.000000e-01 : f32
    %272 = vector.broadcast %cst_77 : f32 to vector<8x128xf32>
    %273 = arith.cmpf oge, %215, %272 : vector<8x128xf32>
    %cst_78 = arith.constant 0.000000e+00 : f32
    %cst_79 = arith.constant 1.000000e+00 : f32
    %274 = vector.broadcast %cst_78 : f32 to vector<8x128xf32>
    %275 = vector.broadcast %cst_79 : f32 to vector<8x128xf32>
    %276 = arith.select %273, %274, %275 : vector<8x128xi1>, vector<8x128xf32>
    %277 = vector.extract_strided_slice %1 {offsets = [0, 0], sizes = [8, 1], strides = [1, 1]} : vector<8x8xf32> to vector<8x1xf32>
    %278 = vector.broadcast %277 : vector<8x1xf32> to vector<8x128xf32>
    %279 = arith.mulf %265, %278 : vector<8x128xf32>
    %280 = vector.extract_strided_slice %0 {offsets = [0, 0], sizes = [8, 1], strides = [1, 1]} : vector<8x8xf32> to vector<8x1xf32>
    %281 = vector.broadcast %280 : vector<8x1xf32> to vector<8x128xf32>
    %282 = arith.mulf %270, %281 : vector<8x128xf32>
    %283 = arith.addf %279, %282 : vector<8x128xf32>
    %284 = arith.mulf %283, %276 : vector<8x128xf32>
    %285 = arith.addf %271, %284 : vector<8x128xf32>
    %286 = arith.mulf %265, %270 : vector<8x128xf32>
    %287 = arith.mulf %270, %265 : vector<8x128xf32>
    %288 = arith.addf %286, %287 : vector<8x128xf32>
    %289 = arith.mulf %270, %270 : vector<8x128xf32>
    %290 = arith.mulf %265, %265 : vector<8x128xf32>
    %291 = arith.subf %289, %290 : vector<8x128xf32>
    %cst_80 = arith.constant 2.500000e-01 : f32
    %292 = vector.broadcast %cst_80 : f32 to vector<8x128xf32>
    %293 = arith.cmpf oge, %215, %292 : vector<8x128xf32>
    %cst_81 = arith.constant 0.000000e+00 : f32
    %cst_82 = arith.constant 5.000000e-01 : f32
    %294 = vector.broadcast %cst_81 : f32 to vector<8x128xf32>
    %295 = vector.broadcast %cst_82 : f32 to vector<8x128xf32>
    %296 = arith.select %293, %294, %295 : vector<8x128xi1>, vector<8x128xf32>
    %297 = vector.extract_strided_slice %1 {offsets = [0, 1], sizes = [8, 1], strides = [1, 1]} : vector<8x8xf32> to vector<8x1xf32>
    %298 = vector.broadcast %297 : vector<8x1xf32> to vector<8x128xf32>
    %299 = arith.mulf %288, %298 : vector<8x128xf32>
    %300 = vector.extract_strided_slice %0 {offsets = [0, 1], sizes = [8, 1], strides = [1, 1]} : vector<8x8xf32> to vector<8x1xf32>
    %301 = vector.broadcast %300 : vector<8x1xf32> to vector<8x128xf32>
    %302 = arith.mulf %291, %301 : vector<8x128xf32>
    %303 = arith.addf %299, %302 : vector<8x128xf32>
    %304 = arith.mulf %303, %296 : vector<8x128xf32>
    %305 = arith.addf %285, %304 : vector<8x128xf32>
    %306 = arith.mulf %288, %270 : vector<8x128xf32>
    %307 = arith.mulf %291, %265 : vector<8x128xf32>
    %308 = arith.addf %306, %307 : vector<8x128xf32>
    %309 = arith.mulf %291, %270 : vector<8x128xf32>
    %310 = arith.mulf %288, %265 : vector<8x128xf32>
    %311 = arith.subf %309, %310 : vector<8x128xf32>
    %cst_83 = arith.constant 0.166666672 : f32
    %312 = vector.broadcast %cst_83 : f32 to vector<8x128xf32>
    %313 = arith.cmpf oge, %215, %312 : vector<8x128xf32>
    %cst_84 = arith.constant 0.000000e+00 : f32
    %cst_85 = arith.constant 0.333333343 : f32
    %314 = vector.broadcast %cst_84 : f32 to vector<8x128xf32>
    %315 = vector.broadcast %cst_85 : f32 to vector<8x128xf32>
    %316 = arith.select %313, %314, %315 : vector<8x128xi1>, vector<8x128xf32>
    %317 = vector.extract_strided_slice %1 {offsets = [0, 2], sizes = [8, 1], strides = [1, 1]} : vector<8x8xf32> to vector<8x1xf32>
    %318 = vector.broadcast %317 : vector<8x1xf32> to vector<8x128xf32>
    %319 = arith.mulf %308, %318 : vector<8x128xf32>
    %320 = vector.extract_strided_slice %0 {offsets = [0, 2], sizes = [8, 1], strides = [1, 1]} : vector<8x8xf32> to vector<8x1xf32>
    %321 = vector.broadcast %320 : vector<8x1xf32> to vector<8x128xf32>
    %322 = arith.mulf %311, %321 : vector<8x128xf32>
    %323 = arith.addf %319, %322 : vector<8x128xf32>
    %324 = arith.mulf %323, %316 : vector<8x128xf32>
    %325 = arith.addf %305, %324 : vector<8x128xf32>
    %326 = arith.mulf %308, %270 : vector<8x128xf32>
    %327 = arith.mulf %311, %265 : vector<8x128xf32>
    %328 = arith.addf %326, %327 : vector<8x128xf32>
    %329 = arith.mulf %311, %270 : vector<8x128xf32>
    %330 = arith.mulf %308, %265 : vector<8x128xf32>
    %331 = arith.subf %329, %330 : vector<8x128xf32>
    %cst_86 = arith.constant 1.250000e-01 : f32
    %332 = vector.broadcast %cst_86 : f32 to vector<8x128xf32>
    %333 = arith.cmpf oge, %215, %332 : vector<8x128xf32>
    %cst_87 = arith.constant 0.000000e+00 : f32
    %cst_88 = arith.constant 2.500000e-01 : f32
    %334 = vector.broadcast %cst_87 : f32 to vector<8x128xf32>
    %335 = vector.broadcast %cst_88 : f32 to vector<8x128xf32>
    %336 = arith.select %333, %334, %335 : vector<8x128xi1>, vector<8x128xf32>
    %337 = vector.extract_strided_slice %1 {offsets = [0, 3], sizes = [8, 1], strides = [1, 1]} : vector<8x8xf32> to vector<8x1xf32>
    %338 = vector.broadcast %337 : vector<8x1xf32> to vector<8x128xf32>
    %339 = arith.mulf %328, %338 : vector<8x128xf32>
    %340 = vector.extract_strided_slice %0 {offsets = [0, 3], sizes = [8, 1], strides = [1, 1]} : vector<8x8xf32> to vector<8x1xf32>
    %341 = vector.broadcast %340 : vector<8x1xf32> to vector<8x128xf32>
    %342 = arith.mulf %331, %341 : vector<8x128xf32>
    %343 = arith.addf %339, %342 : vector<8x128xf32>
    %344 = arith.mulf %343, %336 : vector<8x128xf32>
    %345 = arith.addf %325, %344 : vector<8x128xf32>
    %346 = arith.mulf %328, %270 : vector<8x128xf32>
    %347 = arith.mulf %331, %265 : vector<8x128xf32>
    %348 = arith.addf %346, %347 : vector<8x128xf32>
    %349 = arith.mulf %331, %270 : vector<8x128xf32>
    %350 = arith.mulf %328, %265 : vector<8x128xf32>
    %351 = arith.subf %349, %350 : vector<8x128xf32>
    %cst_89 = arith.constant 1.000000e-01 : f32
    %352 = vector.broadcast %cst_89 : f32 to vector<8x128xf32>
    %353 = arith.cmpf oge, %215, %352 : vector<8x128xf32>
    %cst_90 = arith.constant 0.000000e+00 : f32
    %cst_91 = arith.constant 2.000000e-01 : f32
    %354 = vector.broadcast %cst_90 : f32 to vector<8x128xf32>
    %355 = vector.broadcast %cst_91 : f32 to vector<8x128xf32>
    %356 = arith.select %353, %354, %355 : vector<8x128xi1>, vector<8x128xf32>
    %357 = vector.extract_strided_slice %1 {offsets = [0, 4], sizes = [8, 1], strides = [1, 1]} : vector<8x8xf32> to vector<8x1xf32>
    %358 = vector.broadcast %357 : vector<8x1xf32> to vector<8x128xf32>
    %359 = arith.mulf %348, %358 : vector<8x128xf32>
    %360 = vector.extract_strided_slice %0 {offsets = [0, 4], sizes = [8, 1], strides = [1, 1]} : vector<8x8xf32> to vector<8x1xf32>
    %361 = vector.broadcast %360 : vector<8x1xf32> to vector<8x128xf32>
    %362 = arith.mulf %351, %361 : vector<8x128xf32>
    %363 = arith.addf %359, %362 : vector<8x128xf32>
    %364 = arith.mulf %363, %356 : vector<8x128xf32>
    %365 = arith.addf %345, %364 : vector<8x128xf32>
    %366 = arith.mulf %348, %270 : vector<8x128xf32>
    %367 = arith.mulf %351, %265 : vector<8x128xf32>
    %368 = arith.addf %366, %367 : vector<8x128xf32>
    %369 = arith.mulf %351, %270 : vector<8x128xf32>
    %370 = arith.mulf %348, %265 : vector<8x128xf32>
    %371 = arith.subf %369, %370 : vector<8x128xf32>
    %cst_92 = arith.constant 0.0833333358 : f32
    %372 = vector.broadcast %cst_92 : f32 to vector<8x128xf32>
    %373 = arith.cmpf oge, %215, %372 : vector<8x128xf32>
    %cst_93 = arith.constant 0.000000e+00 : f32
    %cst_94 = arith.constant 0.166666672 : f32
    %374 = vector.broadcast %cst_93 : f32 to vector<8x128xf32>
    %375 = vector.broadcast %cst_94 : f32 to vector<8x128xf32>
    %376 = arith.select %373, %374, %375 : vector<8x128xi1>, vector<8x128xf32>
    %377 = vector.extract_strided_slice %1 {offsets = [0, 5], sizes = [8, 1], strides = [1, 1]} : vector<8x8xf32> to vector<8x1xf32>
    %378 = vector.broadcast %377 : vector<8x1xf32> to vector<8x128xf32>
    %379 = arith.mulf %368, %378 : vector<8x128xf32>
    %380 = vector.extract_strided_slice %0 {offsets = [0, 5], sizes = [8, 1], strides = [1, 1]} : vector<8x8xf32> to vector<8x1xf32>
    %381 = vector.broadcast %380 : vector<8x1xf32> to vector<8x128xf32>
    %382 = arith.mulf %371, %381 : vector<8x128xf32>
    %383 = arith.addf %379, %382 : vector<8x128xf32>
    %384 = arith.mulf %383, %376 : vector<8x128xf32>
    %385 = arith.addf %365, %384 : vector<8x128xf32>
    %386 = arith.mulf %368, %270 : vector<8x128xf32>
    %387 = arith.mulf %371, %265 : vector<8x128xf32>
    %388 = arith.addf %386, %387 : vector<8x128xf32>
    %389 = arith.mulf %371, %270 : vector<8x128xf32>
    %390 = arith.mulf %368, %265 : vector<8x128xf32>
    %391 = arith.subf %389, %390 : vector<8x128xf32>
    %cst_95 = arith.constant 0.0714285746 : f32
    %392 = vector.broadcast %cst_95 : f32 to vector<8x128xf32>
    %393 = arith.cmpf oge, %215, %392 : vector<8x128xf32>
    %cst_96 = arith.constant 0.000000e+00 : f32
    %cst_97 = arith.constant 0.142857149 : f32
    %394 = vector.broadcast %cst_96 : f32 to vector<8x128xf32>
    %395 = vector.broadcast %cst_97 : f32 to vector<8x128xf32>
    %396 = arith.select %393, %394, %395 : vector<8x128xi1>, vector<8x128xf32>
    %397 = vector.extract_strided_slice %1 {offsets = [0, 6], sizes = [8, 1], strides = [1, 1]} : vector<8x8xf32> to vector<8x1xf32>
    %398 = vector.broadcast %397 : vector<8x1xf32> to vector<8x128xf32>
    %399 = arith.mulf %388, %398 : vector<8x128xf32>
    %400 = vector.extract_strided_slice %0 {offsets = [0, 6], sizes = [8, 1], strides = [1, 1]} : vector<8x8xf32> to vector<8x1xf32>
    %401 = vector.broadcast %400 : vector<8x1xf32> to vector<8x128xf32>
    %402 = arith.mulf %391, %401 : vector<8x128xf32>
    %403 = arith.addf %399, %402 : vector<8x128xf32>
    %404 = arith.mulf %403, %396 : vector<8x128xf32>
    %405 = arith.addf %385, %404 : vector<8x128xf32>
    %406 = arith.mulf %388, %270 : vector<8x128xf32>
    %407 = arith.mulf %391, %265 : vector<8x128xf32>
    %408 = arith.addf %406, %407 : vector<8x128xf32>
    %409 = arith.mulf %391, %270 : vector<8x128xf32>
    %410 = arith.mulf %388, %265 : vector<8x128xf32>
    %411 = arith.subf %409, %410 : vector<8x128xf32>
    %cst_98 = arith.constant 6.250000e-02 : f32
    %412 = vector.broadcast %cst_98 : f32 to vector<8x128xf32>
    %413 = arith.cmpf oge, %215, %412 : vector<8x128xf32>
    %cst_99 = arith.constant 0.000000e+00 : f32
    %cst_100 = arith.constant 1.250000e-01 : f32
    %414 = vector.broadcast %cst_99 : f32 to vector<8x128xf32>
    %415 = vector.broadcast %cst_100 : f32 to vector<8x128xf32>
    %416 = arith.select %413, %414, %415 : vector<8x128xi1>, vector<8x128xf32>
    %417 = vector.extract_strided_slice %1 {offsets = [0, 7], sizes = [8, 1], strides = [1, 1]} : vector<8x8xf32> to vector<8x1xf32>
    %418 = vector.broadcast %417 : vector<8x1xf32> to vector<8x128xf32>
    %419 = arith.mulf %408, %418 : vector<8x128xf32>
    %420 = vector.extract_strided_slice %0 {offsets = [0, 7], sizes = [8, 1], strides = [1, 1]} : vector<8x8xf32> to vector<8x1xf32>
    %421 = vector.broadcast %420 : vector<8x1xf32> to vector<8x128xf32>
    %422 = arith.mulf %411, %421 : vector<8x128xf32>
    %423 = arith.addf %419, %422 : vector<8x128xf32>
    %424 = arith.mulf %423, %416 : vector<8x128xf32>
    %425 = arith.addf %405, %424 : vector<8x128xf32>
    %c0_101 = arith.constant 0 : index
    %c128_102 = arith.constant 128 : index
    %426 = vector.load %arg7[%c0_101, %c128_102] : memref<8x256xf32, #tpu.memory_space<vmem>>, vector<8x128xf32>
    tpu.vector_store %arg7[%c0_101, %c128_102], %425 {strides = array<i32>} : memref<8x256xf32, #tpu.memory_space<vmem>>, vector<8x128xf32>,
    return
  }
  func.func @transform_0(%arg0: i32, %arg1: i32) -> (i32, i32) {
    %c0_i32 = arith.constant 0 : i32
    return %arg0, %arg1 : i32, i32
  }
  func.func @transform_1(%arg0: i32, %arg1: i32) -> (i32, i32) {
    %c0_i32 = arith.constant 0 : i32
    return %arg0, %arg1 : i32, i32
  }
  func.func @transform_2(%arg0: i32, %arg1: i32) -> (i32, i32) {
    %c0_i32 = arith.constant 0 : i32
    %c0_i32_0 = arith.constant 0 : i32
    return %arg0, %c0_i32 : i32, i32
  }
  func.func @transform_3(%arg0: i32, %arg1: i32) -> (i32, i32) {
    %c0_i32 = arith.constant 0 : i32
    %c0_i32_0 = arith.constant 0 : i32
    return %arg0, %c0_i32 : i32, i32
  }
  func.func @transform_4(%arg0: i32, %arg1: i32) -> (i32, i32) {
    %c0_i32 = arith.constant 0 : i32
    %c0_i32_0 = arith.constant 0 : i32
    %c0_i32_1 = arith.constant 0 : i32
    return %c0_i32, %c0_i32_0 : i32, i32
  }
  func.func @transform_5(%arg0: i32, %arg1: i32) -> (i32, i32) {
    %c0_i32 = arith.constant 0 : i32
    return %arg0, %arg1 : i32, i32
  }
}

</mosaic_0001>

<llo_original>
// kernel: tpu_custom_call.1
$region0: #{tpu_custom_call.1}
  #allocation0 [shape = 'u32[]', space=smem, size = 0x4, offset = 0x4, fixed_abs, tag = 'smem constant byte address 0x4 - core index']
  #allocation1 [shape = 'u32[144,128]{1,0:T(1,128)}', space=vmem, size = 0x12000, scoped, tag = 'internal scratch']
  %s0 = inlined_call_operand.hbm [shape: f32[8,256], index: 0, kind: input, shape index: {}]
  %s1 = inlined_call_operand.hbm [shape: f32[8,256], index: 1, kind: input, shape index: {}]
  %s2 = inlined_call_operand.hbm [shape: f32[8,8], index: 2, kind: input, shape index: {}]
  %s3 = inlined_call_operand.hbm [shape: f32[8,8], index: 3, kind: input, shape index: {}]
  %s4 = inlined_call_operand.hbm [shape: f32[128,128], index: 4, kind: input, shape index: {}]
  %s5 = inlined_call_operand.hbm [shape: f32[8,256], index: 5, kind: output, shape index: {}]
  %s6 = sld [smem:[#allocation0]]
  $region50: #{tpu_custom_call.1} parent=0
    _
  %s8 = ssub.s32 1, %s6
  %s9 = scalar_select 0, %s8, %s6
  $region1: #{tpu_custom_call.1} parent=0
    #allocation2 [shape = 'u8[8192]{0}', space=vmem, size = 0x2000, scoped, tag = 'input window, operand 0, single buffered']
    #allocation3 [shape = 's32[1]{0}', space=sflag, size = 0x4, scoped, tag = 'scoped memory for tpu_custom_call.1']
    #allocation4 [shape = 's32[1]{0}', space=sflag, size = 0x4, scoped, tag = 'scoped memory for tpu_custom_call.1']
    #allocation5 [shape = 'u8[8192]{0}', space=vmem, size = 0x2000, scoped, tag = 'input window, operand 1, single buffered']
    #allocation6 [shape = 's32[1]{0}', space=sflag, size = 0x4, scoped, tag = 'scoped memory for tpu_custom_call.1']
    #allocation7 [shape = 'u8[4096]{0}', space=vmem, size = 0x1000, scoped, tag = 'input window, operand 2, single buffered']
    #allocation8 [shape = 'u8[4096]{0}', space=vmem, size = 0x1000, scoped, tag = 'input window, operand 3, single buffered']
    #allocation9 [shape = 's32[1]{0}', space=sflag, size = 0x4, scoped, tag = 'scoped memory for tpu_custom_call.1']
    #allocation10 [shape = 'u8[65536]{0}', space=vmem, size = 0x10000, scoped, tag = 'input window, operand 4, single buffered']
    #allocation11 [shape = 'u8[8192]{0}', space=vmem, size = 0x2000, scoped, tag = 'output window, operand 0, single buffered']
    %10 = vsyncpa [#allocation3], 0
    %11 = vsyncpa [#allocation6], 0
    %12 = vsyncpa [#allocation9], 0
    %13 = vsyncpa [#allocation4], 0
    // Predicated region
    $region2: #{tpu_custom_call.1} parent=1 // pred_check
      _
    $region3: #{tpu_custom_call.1} parent=1 // pred_check_branch
      %15 = sbr.rel (0) target = $region5
    $region4: #{tpu_custom_call.1} parent=1 // pred_region
      %s17 = ssub.s32 256, 256
      %18 = vsyncadd [#allocation3], %s17
      %s20 = sshll.u32 [#allocation2], 4
      %s21 = int_to_ptr.vmem [resolvable:$true] %s20
      %23 = dma.hbm_to_vmem [thread:$0]  %s0, 256, %s21, [#allocation3]
    $region5: #{tpu_custom_call.1} parent=1 // pred_fallthru
      _
    // Predicated region
    $region6: #{tpu_custom_call.1} parent=1 // pred_check
      _
    $region7: #{tpu_custom_call.1} parent=1 // pred_check_branch
      %25 = sbr.rel (0) target = $region9
    $region8: #{tpu_custom_call.1} parent=1 // pred_region
      %s27 = ssub.s32 256, 256
      %28 = vsyncadd [#allocation6], %s27
      %s30 = sshll.u32 [#allocation5], 4
      %s31 = int_to_ptr.vmem [resolvable:$true] %s30
      %33 = dma.hbm_to_vmem [thread:$0]  %s1, 256, %s31, [#allocation6]
    $region9: #{tpu_custom_call.1} parent=1 // pred_fallthru
      _
    // Predicated region
    $region10: #{tpu_custom_call.1} parent=1 // pred_check
      _
    $region11: #{tpu_custom_call.1} parent=1 // pred_check_branch
      %35 = sbr.rel (0) target = $region13
    $region12: #{tpu_custom_call.1} parent=1 // pred_region
      %s37 = ssub.s32 128, 128
      %38 = vsyncadd [#allocation6], %s37
      %s40 = sshll.u32 [#allocation7], 4
      %s41 = int_to_ptr.vmem [resolvable:$true] %s40
      %43 = dma.hbm_to_vmem [thread:$0]  %s2, 128, %s41, [#allocation6]
    $region13: #{tpu_custom_call.1} parent=1 // pred_fallthru
      _
    // Predicated region
    $region14: #{tpu_custom_call.1} parent=1 // pred_check
      _
    $region15: #{tpu_custom_call.1} parent=1 // pred_check_branch
      %45 = sbr.rel (0) target = $region17
    $region16: #{tpu_custom_call.1} parent=1 // pred_region
      %s47 = ssub.s32 128, 128
      %48 = vsyncadd [#allocation9], %s47
      %s50 = sshll.u32 [#allocation8], 4
      %s51 = int_to_ptr.vmem [resolvable:$true] %s50
      %53 = dma.hbm_to_vmem [thread:$0]  %s3, 128, %s51, [#allocation9]
    $region17: #{tpu_custom_call.1} parent=1 // pred_fallthru
      _
    // Predicated region
    $region18: #{tpu_custom_call.1} parent=1 // pred_check
      _
    $region19: #{tpu_custom_call.1} parent=1 // pred_check_branch
      %55 = sbr.rel (0) target = $region21
    $region20: #{tpu_custom_call.1} parent=1 // pred_region
      %s57 = ssub.s32 2048, 2048
      %58 = vsyncadd [#allocation9], %s57
      %s59 = sshll.u32 [#allocation10], 4
      %s60 = int_to_ptr.vmem [resolvable:$true] %s59
      %65 = dma.hbm_to_vmem [thread:$0]  %s4, 2048, %s60, [#allocation9], 128, 128, 8
    $region21: #{tpu_custom_call.1} parent=1 // pred_fallthru
      _
    // Predicated region
    $region22: #{tpu_custom_call.1} parent=1 // pred_check
      _
    $region23: #{tpu_custom_call.1} parent=1 // pred_check_branch
      %67 = sbr.rel (0) target = $region25
    $region24: #{tpu_custom_call.1} parent=1 // pred_region
      %68 = dma.done [#allocation3], 256
    $region25: #{tpu_custom_call.1} parent=1 // pred_fallthru
      _
    // Predicated region
    $region26: #{tpu_custom_call.1} parent=1 // pred_check
      _
    $region27: #{tpu_custom_call.1} parent=1 // pred_check_branch
      %70 = sbr.rel (0) target = $region29
    $region28: #{tpu_custom_call.1} parent=1 // pred_region
      %71 = dma.done [#allocation6], 256
    $region29: #{tpu_custom_call.1} parent=1 // pred_fallthru
      _
    // Predicated region
    $region30: #{tpu_custom_call.1} parent=1 // pred_check
      _
    $region31: #{tpu_custom_call.1} parent=1 // pred_check_branch
      %73 = sbr.rel (0) target = $region33
    $region32: #{tpu_custom_call.1} parent=1 // pred_region
      %74 = dma.done [#allocation6], 128
    $region33: #{tpu_custom_call.1} parent=1 // pred_fallthru
      _
    // Predicated region
    $region34: #{tpu_custom_call.1} parent=1 // pred_check
      _
    $region35: #{tpu_custom_call.1} parent=1 // pred_check_branch
      %76 = sbr.rel (0) target = $region37
    $region36: #{tpu_custom_call.1} parent=1 // pred_region
      %77 = dma.done [#allocation9], 128
    $region37: #{tpu_custom_call.1} parent=1 // pred_fallthru
      _
    // Predicated region
    $region38: #{tpu_custom_call.1} parent=1 // pred_check
      _
    $region39: #{tpu_custom_call.1} parent=1 // pred_check_branch
      %79 = sbr.rel (0) target = $region41
    $region40: #{tpu_custom_call.1} parent=1 // pred_region
      %80 = dma.done [#allocation9], 2048
    $region41: #{tpu_custom_call.1} parent=1 // pred_fallthru
      _
    %v81 = vld [vmem:[#allocation7] sm:$0xff]
    %v82 = vld [vmem:[#allocation8] sm:$0xff]
    %v83 = vld [vmem:[#allocation2] sm:$0xff]
    %v84 = vld [vmem:[#allocation10] sm:$0xff]
    %v85 = vld [vmem:[#allocation10 + $0x8] sm:$0xff]
    %v86 = vld [vmem:[#allocation10 + $0x10] sm:$0xff]
    %v87 = vld [vmem:[#allocation10 + $0x18] sm:$0xff]
    %v88 = vld [vmem:[#allocation10 + $0x20] sm:$0xff]
    %v89 = vld [vmem:[#allocation10 + $0x28] sm:$0xff]
    %v90 = vld [vmem:[#allocation10 + $0x30] sm:$0xff]
    %v91 = vld [vmem:[#allocation10 + $0x38] sm:$0xff]
    %v92 = vld [vmem:[#allocation10 + $0x40] sm:$0xff]
    %v93 = vld [vmem:[#allocation10 + $0x48] sm:$0xff]
    %v94 = vld [vmem:[#allocation10 + $0x50] sm:$0xff]
    %v95 = vld [vmem:[#allocation10 + $0x58] sm:$0xff]
    %v96 = vld [vmem:[#allocation10 + $0x60] sm:$0xff]
    %v97 = vld [vmem:[#allocation10 + $0x68] sm:$0xff]
    %v98 = vld [vmem:[#allocation10 + $0x70] sm:$0xff]
    %v99 = vld [vmem:[#allocation10 + $0x78] sm:$0xff]
    %100 = vmatprep.subr.mxu0 0.0
    %v101 = vand.u32 %v99, 4294901760
    %102 = vmatpush1.msra.mxu0 %v101
    %103 = vmatprep.subr.mxu0 0.0
    %v104 = vand.u32 %v98, 4294901760
    %105 = vmatpush1.msra.mxu0 %v104
    %106 = vmatprep.subr.mxu0 0.0
    %v107 = vand.u32 %v97, 4294901760
    %108 = vmatpush1.msra.mxu0 %v107
    %109 = vmatprep.subr.mxu0 0.0
    %v110 = vand.u32 %v96, 4294901760
    %111 = vmatpush1.msra.mxu0 %v110
    %112 = vmatprep.subr.mxu0 0.0
    %v113 = vand.u32 %v95, 4294901760
    %114 = vmatpush1.msra.mxu0 %v113
    %115 = vmatprep.subr.mxu0 0.0
    %v116 = vand.u32 %v94, 4294901760
    %117 = vmatpush1.msra.mxu0 %v116
    %118 = vmatprep.subr.mxu0 0.0
    %v119 = vand.u32 %v93, 4294901760
    %120 = vmatpush1.msra.mxu0 %v119
    %121 = vmatprep.subr.mxu0 0.0
    %v122 = vand.u32 %v92, 4294901760
    %123 = vmatpush1.msra.mxu0 %v122
    %124 = vmatprep.subr.mxu0 0.0
    %v125 = vand.u32 %v91, 4294901760
    %126 = vmatpush1.msra.mxu0 %v125
    %127 = vmatprep.subr.mxu0 0.0
    %v128 = vand.u32 %v90, 4294901760
    %129 = vmatpush1.msra.mxu0 %v128
    %130 = vmatprep.subr.mxu0 0.0
    %v131 = vand.u32 %v89, 4294901760
    %132 = vmatpush1.msra.mxu0 %v131
    %133 = vmatprep.subr.mxu0 0.0
    %v134 = vand.u32 %v88, 4294901760
    %135 = vmatpush1.msra.mxu0 %v134
    %136 = vmatprep.subr.mxu0 0.0
    %v137 = vand.u32 %v87, 4294901760
    %138 = vmatpush1.msra.mxu0 %v137
    %139 = vmatprep.subr.mxu0 0.0
    %v140 = vand.u32 %v86, 4294901760
    %141 = vmatpush1.msra.mxu0 %v140
    %142 = vmatprep.subr.mxu0 0.0
    %v143 = vand.u32 %v85, 4294901760
    %144 = vmatpush1.msra.mxu0 %v143
    %145 = vmatprep.subr.mxu0 0.0
    %v146 = vand.u32 %v84, 4294901760
    %147 = vmatpush1.msra.mxu0 %v146
    %148 = vmatprep.subr.mxu0 0.0
    %149 = vmatpush2.msra.mxu0 0.0
    %150 = vmatprep.subr.mxu0 0.0
    %151 = vmatpush2.msra.mxu0 0.0
    %152 = vmatprep.subr.mxu0 0.0
    %153 = vmatpush2.msra.mxu0 0.0
    %154 = vmatprep.subr.mxu0 0.0
    %155 = vmatpush2.msra.mxu0 0.0
    %156 = vmatprep.subr.mxu0 0.0
    %157 = vmatpush2.msra.mxu0 0.0
    %158 = vmatprep.subr.mxu0 0.0
    %159 = vmatpush2.msra.mxu0 0.0
    %160 = vmatprep.subr.mxu0 0.0
    %161 = vmatpush2.msra.mxu0 0.0
    %162 = vmatprep.subr.mxu0 0.0
    %163 = vmatpush2.msra.mxu0 0.0
    %164 = vmatprep.subr.mxu0 0.0
    %165 = vmatpush2.msra.mxu0 0.0
    %166 = vmatprep.subr.mxu0 0.0
    %167 = vmatpush2.msra.mxu0 0.0
    %168 = vmatprep.subr.mxu0 0.0
    %169 = vmatpush2.msra.mxu0 0.0
    %170 = vmatprep.subr.mxu0 0.0
    %171 = vmatpush2.msra.mxu0 0.0
    %172 = vmatprep.subr.mxu0 0.0
    %173 = vmatpush2.msra.mxu0 0.0
    %174 = vmatprep.subr.mxu0 0.0
    %175 = vmatpush2.msra.mxu0 0.0
    %176 = vmatprep.subr.mxu0 0.0
    %177 = vmatpush2.msra.mxu0 0.0
    %178 = vmatprep.subr.mxu0 0.0
    %179 = vmatpush2.msra.mxu0 0.0
    %180 = vmatprep.mubr.f32.mxu0 0.0
    %v181 = vand.u32 %v83, 4294901760
    %v182 = vsub.f32 %v83, %v181
    %v183 = vand.u32 %v182, 4294901760
    %v184 = vsub.f32 %v182, %v183
    %v185 = vand.u32 %v184, 4294901760
    %186 = vmatmul.mubr.f32.gmra.mxu0 %v185
    %v187 = vpop.f32.mrf.mxu0
    %v188 = vadd.f32 0.0, %v187
    %v189 = vpop.f32.mrf.mxu0
    %190 = vdwg.mxu0
    %191 = vmatprep.subr.mxu0 0.0
    %v192 = vand.u32 %v99, 4294901760
    %v193 = vsub.f32 %v99, %v192
    %v194 = vand.u32 %v193, 4294901760
    %v195 = vsub.f32 %v193, %v194
    %v196 = vand.u32 %v195, 4294901760
    %197 = vmatpush1.msra.mxu0 %v196
    %198 = vmatprep.subr.mxu0 0.0
    %v199 = vand.u32 %v98, 4294901760
    %v200 = vsub.f32 %v98, %v199
    %v201 = vand.u32 %v200, 4294901760
    %v202 = vsub.f32 %v200, %v201
    %v203 = vand.u32 %v202, 4294901760
    %204 = vmatpush1.msra.mxu0 %v203
    %205 = vmatprep.subr.mxu0 0.0
    %v206 = vand.u32 %v97, 4294901760
    %v207 = vsub.f32 %v97, %v206
    %v208 = vand.u32 %v207, 4294901760
    %v209 = vsub.f32 %v207, %v208
    %v210 = vand.u32 %v209, 4294901760
    %211 = vmatpush1.msra.mxu0 %v210
    %212 = vmatprep.subr.mxu0 0.0
    %v213 = vand.u32 %v96, 4294901760
    %v214 = vsub.f32 %v96, %v213
    %v215 = vand.u32 %v214, 4294901760
    %v216 = vsub.f32 %v214, %v215
    %v217 = vand.u32 %v216, 4294901760
    %218 = vmatpush1.msra.mxu0 %v217
    %219 = vmatprep.subr.mxu0 0.0
    %v220 = vand.u32 %v95, 4294901760
    %v221 = vsub.f32 %v95, %v220
    %v222 = vand.u32 %v221, 4294901760
    %v223 = vsub.f32 %v221, %v222
    %v224 = vand.u32 %v223, 4294901760
    %225 = vmatpush1.msra.mxu0 %v224
    %226 = vmatprep.subr.mxu0 0.0
    %v227 = vand.u32 %v94, 4294901760
    %v228 = vsub.f32 %v94, %v227
    %v229 = vand.u32 %v228, 4294901760
    %v230 = vsub.f32 %v228, %v229
    %v231 = vand.u32 %v230, 4294901760
    %232 = vmatpush1.msra.mxu0 %v231
    %233 = vmatprep.subr.mxu0 0.0
    %v234 = vand.u32 %v93, 4294901760
    %v235 = vsub.f32 %v93, %v234
    %v236 = vand.u32 %v235, 4294901760
    %v237 = vsub.f32 %v235, %v236
    %v238 = vand.u32 %v237, 4294901760
    %239 = vmatpush1.msra.mxu0 %v238
    %240 = vmatprep.subr.mxu0 0.0
    %v241 = vand.u32 %v92, 4294901760
    %v242 = vsub.f32 %v92, %v241
    %v243 = vand.u32 %v242, 4294901760
    %v244 = vsub.f32 %v242, %v243
    %v245 = vand.u32 %v244, 4294901760
    %246 = vmatpush1.msra.mxu0 %v245
    %247 = vmatprep.subr.mxu0 0.0
    %v248 = vand.u32 %v91, 4294901760
    %v249 = vsub.f32 %v91, %v248
    %v250 = vand.u32 %v249, 4294901760
    %v251 = vsub.f32 %v249, %v250
    %v252 = vand.u32 %v251, 4294901760
    %253 = vmatpush1.msra.mxu0 %v252
    %254 = vmatprep.subr.mxu0 0.0
    %v255 = vand.u32 %v90, 4294901760
    %v256 = vsub.f32 %v90, %v255
    %v257 = vand.u32 %v256, 4294901760
    %v258 = vsub.f32 %v256, %v257
    %v259 = vand.u32 %v258, 4294901760
    %260 = vmatpush1.msra.mxu0 %v259
    %261 = vmatprep.subr.mxu0 0.0
    %v262 = vand.u32 %v89, 4294901760
    %v263 = vsub.f32 %v89, %v262
    %v264 = vand.u32 %v263, 4294901760
    %v265 = vsub.f32 %v263, %v264
    %v266 = vand.u32 %v265, 4294901760
    %267 = vmatpush1.msra.mxu0 %v266
    %268 = vmatprep.subr.mxu0 0.0
    %v269 = vand.u32 %v88, 4294901760
    %v270 = vsub.f32 %v88, %v269
    %v271 = vand.u32 %v270, 4294901760
    %v272 = vsub.f32 %v270, %v271
    %v273 = vand.u32 %v272, 4294901760
    %274 = vmatpush1.msra.mxu0 %v273
    %275 = vmatprep.subr.mxu0 0.0
    %v276 = vand.u32 %v87, 4294901760
    %v277 = vsub.f32 %v87, %v276
    %v278 = vand.u32 %v277, 4294901760
    %v279 = vsub.f32 %v277, %v278
    %v280 = vand.u32 %v279, 4294901760
    %281 = vmatpush1.msra.mxu0 %v280
    %282 = vmatprep.subr.mxu0 0.0
    %v283 = vand.u32 %v86, 4294901760
    %v284 = vsub.f32 %v86, %v283
    %v285 = vand.u32 %v284, 4294901760
    %v286 = vsub.f32 %v284, %v285
    %v287 = vand.u32 %v286, 4294901760
    %288 = vmatpush1.msra.mxu0 %v287
    %289 = vmatprep.subr.mxu0 0.0
    %v290 = vand.u32 %v85, 4294901760
    %v291 = vsub.f32 %v85, %v290
    %v292 = vand.u32 %v291, 4294901760
    %v293 = vsub.f32 %v291, %v292
    %v294 = vand.u32 %v293, 4294901760
    %295 = vmatpush1.msra.mxu0 %v294
    %296 = vmatprep.subr.mxu0 0.0
    %v297 = vand.u32 %v84, 4294901760
    %v298 = vsub.f32 %v84, %v297
    %v299 = vand.u32 %v298, 4294901760
    %v300 = vsub.f32 %v298, %v299
    %v301 = vand.u32 %v300, 4294901760
    %302 = vmatpush1.msra.mxu0 %v301
    %303 = vmatprep.subr.mxu0 0.0
    %304 = vmatpush2.msra.mxu0 0.0
    %305 = vmatprep.subr.mxu0 0.0
    %306 = vmatpush2.msra.mxu0 0.0
    %307 = vmatprep.subr.mxu0 0.0
    %308 = vmatpush2.msra.mxu0 0.0
    %309 = vmatprep.subr.mxu0 0.0
    %310 = vmatpush2.msra.mxu0 0.0
    %311 = vmatprep.subr.mxu0 0.0
    %312 = vmatpush2.msra.mxu0 0.0
    %313 = vmatprep.subr.mxu0 0.0
    %314 = vmatpush2.msra.mxu0 0.0
    %315 = vmatprep.subr.mxu0 0.0
    %316 = vmatpush2.msra.mxu0 0.0
    %317 = vmatprep.subr.mxu0 0.0
    %318 = vmatpush2.msra.mxu0 0.0
    %319 = vmatprep.subr.mxu0 0.0
    %320 = vmatpush2.msra.mxu0 0.0
    %321 = vmatprep.subr.mxu0 0.0
    %322 = vmatpush2.msra.mxu0 0.0
    %323 = vmatprep.subr.mxu0 0.0
    %324 = vmatpush2.msra.mxu0 0.0
    %325 = vmatprep.subr.mxu0 0.0
    %326 = vmatpush2.msra.mxu0 0.0
    %327 = vmatprep.subr.mxu0 0.0
    %328 = vmatpush2.msra.mxu0 0.0
    %329 = vmatprep.subr.mxu0 0.0
    %330 = vmatpush2.msra.mxu0 0.0
    %331 = vmatprep.subr.mxu0 0.0
    %332 = vmatpush2.msra.mxu0 0.0
    %333 = vmatprep.subr.mxu0 0.0
    %334 = vmatpush2.msra.mxu0 0.0
    %335 = vmatprep.mubr.f32.mxu0 0.0
    %v336 = vand.u32 %v83, 4294901760
    %337 = vmatmul.mubr.f32.gmra.mxu0 %v336
    %v338 = vpop.f32.mrf.mxu0
    %v339 = vadd.f32 %v188, %v338
    %v340 = vpop.f32.mrf.mxu0
    %341 = vdwg.mxu0
    %342 = vmatprep.subr.mxu0 0.0
    %v343 = vand.u32 %v99, 4294901760
    %v344 = vsub.f32 %v99, %v343
    %345 = vmatpush1.msra.mxu0 %v344
    %346 = vmatprep.subr.mxu0 0.0
    %v347 = vand.u32 %v98, 4294901760
    %v348 = vsub.f32 %v98, %v347
    %349 = vmatpush1.msra.mxu0 %v348
    %350 = vmatprep.subr.mxu0 0.0
    %v351 = vand.u32 %v97, 4294901760
    %v352 = vsub.f32 %v97, %v351
    %353 = vmatpush1.msra.mxu0 %v352
    %354 = vmatprep.subr.mxu0 0.0
    %v355 = vand.u32 %v96, 4294901760
    %v356 = vsub.f32 %v96, %v355
    %357 = vmatpush1.msra.mxu0 %v356
    %358 = vmatprep.subr.mxu0 0.0
    %v359 = vand.u32 %v95, 4294901760
    %v360 = vsub.f32 %v95, %v359
    %361 = vmatpush1.msra.mxu0 %v360
    %362 = vmatprep.subr.mxu0 0.0
    %v363 = vand.u32 %v94, 4294901760
    %v364 = vsub.f32 %v94, %v363
    %365 = vmatpush1.msra.mxu0 %v364
    %366 = vmatprep.subr.mxu0 0.0
    %v367 = vand.u32 %v93, 4294901760
    %v368 = vsub.f32 %v93, %v367
    %369 = vmatpush1.msra.mxu0 %v368
    %370 = vmatprep.subr.mxu0 0.0
    %v371 = vand.u32 %v92, 4294901760
    %v372 = vsub.f32 %v92, %v371
    %373 = vmatpush1.msra.mxu0 %v372
    %374 = vmatprep.subr.mxu0 0.0
    %v375 = vand.u32 %v91, 4294901760
    %v376 = vsub.f32 %v91, %v375
    %377 = vmatpush1.msra.mxu0 %v376
    %378 = vmatprep.subr.mxu0 0.0
    %v379 = vand.u32 %v90, 4294901760
    %v380 = vsub.f32 %v90, %v379
    %381 = vmatpush1.msra.mxu0 %v380
    %382 = vmatprep.subr.mxu0 0.0
    %v383 = vand.u32 %v89, 4294901760
    %v384 = vsub.f32 %v89, %v383
    %385 = vmatpush1.msra.mxu0 %v384
    %386 = vmatprep.subr.mxu0 0.0
    %v387 = vand.u32 %v88, 4294901760
    %v388 = vsub.f32 %v88, %v387
    %389 = vmatpush1.msra.mxu0 %v388
    %390 = vmatprep.subr.mxu0 0.0
    %v391 = vand.u32 %v87, 4294901760
    %v392 = vsub.f32 %v87, %v391
    %393 = vmatpush1.msra.mxu0 %v392
    %394 = vmatprep.subr.mxu0 0.0
    %v395 = vand.u32 %v86, 4294901760
    %v396 = vsub.f32 %v86, %v395
    %397 = vmatpush1.msra.mxu0 %v396
    %398 = vmatprep.subr.mxu0 0.0
    %v399 = vand.u32 %v85, 4294901760
    %v400 = vsub.f32 %v85, %v399
    %401 = vmatpush1.msra.mxu0 %v400
    %402 = vmatprep.subr.mxu0 0.0
    %v403 = vand.u32 %v84, 4294901760
    %v404 = vsub.f32 %v84, %v403
    %405 = vmatpush1.msra.mxu0 %v404
    %406 = vmatprep.subr.mxu0 0.0
    %407 = vmatpush2.msra.mxu0 0.0
    %408 = vmatprep.subr.mxu0 0.0
    %409 = vmatpush2.msra.mxu0 0.0
    %410 = vmatprep.subr.mxu0 0.0
    %411 = vmatpush2.msra.mxu0 0.0
    %412 = vmatprep.subr.mxu0 0.0
    %413 = vmatpush2.msra.mxu0 0.0
    %414 = vmatprep.subr.mxu0 0.0
    %415 = vmatpush2.msra.mxu0 0.0
    %416 = vmatprep.subr.mxu0 0.0
    %417 = vmatpush2.msra.mxu0 0.0
    %418 = vmatprep.subr.mxu0 0.0
    %419 = vmatpush2.msra.mxu0 0.0
    %420 = vmatprep.subr.mxu0 0.0
    %421 = vmatpush2.msra.mxu0 0.0
    %422 = vmatprep.subr.mxu0 0.0
    %423 = vmatpush2.msra.mxu0 0.0
    %424 = vmatprep.subr.mxu0 0.0
    %425 = vmatpush2.msra.mxu0 0.0
    %426 = vmatprep.subr.mxu0 0.0
    %427 = vmatpush2.msra.mxu0 0.0
    %428 = vmatprep.subr.mxu0 0.0
    %429 = vmatpush2.msra.mxu0 0.0
    %430 = vmatprep.subr.mxu0 0.0
    %431 = vmatpush2.msra.mxu0 0.0
    %432 = vmatprep.subr.mxu0 0.0
    %433 = vmatpush2.msra.mxu0 0.0
    %434 = vmatprep.subr.mxu0 0.0
    %435 = vmatpush2.msra.mxu0 0.0
    %436 = vmatprep.subr.mxu0 0.0
    %437 = vmatpush2.msra.mxu0 0.0
    %438 = vmatprep.mubr.f32.mxu0 0.0
    %v439 = vand.u32 %v83, 4294901760
    %v440 = vsub.f32 %v83, %v439
    %441 = vmatmul.mubr.f32.gmra.mxu0 %v440
    %v442 = vpop.f32.mrf.mxu0
    %v443 = vadd.f32 %v339, %v442
    %v444 = vpop.f32.mrf.mxu0
    %445 = vdwg.mxu0
    %446 = vmatprep.subr.mxu0 0.0
    %v447 = vand.u32 %v99, 4294901760
    %448 = vmatpush1.msra.mxu0 %v447
    %449 = vmatprep.subr.mxu0 0.0
    %v450 = vand.u32 %v98, 4294901760
    %451 = vmatpush1.msra.mxu0 %v450
    %452 = vmatprep.subr.mxu0 0.0
    %v453 = vand.u32 %v97, 4294901760
    %454 = vmatpush1.msra.mxu0 %v453
    %455 = vmatprep.subr.mxu0 0.0
    %v456 = vand.u32 %v96, 4294901760
    %457 = vmatpush1.msra.mxu0 %v456
    %458 = vmatprep.subr.mxu0 0.0
    %v459 = vand.u32 %v95, 4294901760
    %460 = vmatpush1.msra.mxu0 %v459
    %461 = vmatprep.subr.mxu0 0.0
    %v462 = vand.u32 %v94, 4294901760
    %463 = vmatpush1.msra.mxu0 %v462
    %464 = vmatprep.subr.mxu0 0.0
    %v465 = vand.u32 %v93, 4294901760
    %466 = vmatpush1.msra.mxu0 %v465
    %467 = vmatprep.subr.mxu0 0.0
    %v468 = vand.u32 %v92, 4294901760
    %469 = vmatpush1.msra.mxu0 %v468
    %470 = vmatprep.subr.mxu0 0.0
    %v471 = vand.u32 %v91, 4294901760
    %472 = vmatpush1.msra.mxu0 %v471
    %473 = vmatprep.subr.mxu0 0.0
    %v474 = vand.u32 %v90, 4294901760
    %475 = vmatpush1.msra.mxu0 %v474
    %476 = vmatprep.subr.mxu0 0.0
    %v477 = vand.u32 %v89, 4294901760
    %478 = vmatpush1.msra.mxu0 %v477
    %479 = vmatprep.subr.mxu0 0.0
    %v480 = vand.u32 %v88, 4294901760
    %481 = vmatpush1.msra.mxu0 %v480
    %482 = vmatprep.subr.mxu0 0.0
    %v483 = vand.u32 %v87, 4294901760
    %484 = vmatpush1.msra.mxu0 %v483
    %485 = vmatprep.subr.mxu0 0.0
    %v486 = vand.u32 %v86, 4294901760
    %487 = vmatpush1.msra.mxu0 %v486
    %488 = vmatprep.subr.mxu0 0.0
    %v489 = vand.u32 %v85, 4294901760
    %490 = vmatpush1.msra.mxu0 %v489
    %491 = vmatprep.subr.mxu0 0.0
    %v492 = vand.u32 %v84, 4294901760
    %493 = vmatpush1.msra.mxu0 %v492
    %494 = vmatprep.subr.mxu0 0.0
    %495 = vmatpush2.msra.mxu0 0.0
    %496 = vmatprep.subr.mxu0 0.0
    %497 = vmatpush2.msra.mxu0 0.0
    %498 = vmatprep.subr.mxu0 0.0
    %499 = vmatpush2.msra.mxu0 0.0
    %500 = vmatprep.subr.mxu0 0.0
    %501 = vmatpush2.msra.mxu0 0.0
    %502 = vmatprep.subr.mxu0 0.0
    %503 = vmatpush2.msra.mxu0 0.0
    %504 = vmatprep.subr.mxu0 0.0
    %505 = vmatpush2.msra.mxu0 0.0
    %506 = vmatprep.subr.mxu0 0.0
    %507 = vmatpush2.msra.mxu0 0.0
    %508 = vmatprep.subr.mxu0 0.0
    %509 = vmatpush2.msra.mxu0 0.0
    %510 = vmatprep.subr.mxu0 0.0
    %511 = vmatpush2.msra.mxu0 0.0
    %512 = vmatprep.subr.mxu0 0.0
    %513 = vmatpush2.msra.mxu0 0.0
    %514 = vmatprep.subr.mxu0 0.0
    %515 = vmatpush2.msra.mxu0 0.0
    %516 = vmatprep.subr.mxu0 0.0
    %517 = vmatpush2.msra.mxu0 0.0
    %518 = vmatprep.subr.mxu0 0.0
    %519 = vmatpush2.msra.mxu0 0.0
    %520 = vmatprep.subr.mxu0 0.0
    %521 = vmatpush2.msra.mxu0 0.0
    %522 = vmatprep.subr.mxu0 0.0
    %523 = vmatpush2.msra.mxu0 0.0
    %524 = vmatprep.subr.mxu0 0.0
    %525 = vmatpush2.msra.mxu0 0.0
    %526 = vmatprep.mubr.f32.mxu0 0.0
    %v527 = vand.u32 %v83, 4294901760
    %v528 = vsub.f32 %v83, %v527
    %v529 = vand.u32 %v528, 4294901760
    %530 = vmatmul.mubr.f32.gmra.mxu0 %v529
    %v531 = vpop.f32.mrf.mxu0
    %v532 = vadd.f32 %v443, %v531
    %v533 = vpop.f32.mrf.mxu0
    %534 = vdwg.mxu0
    %535 = vmatprep.subr.mxu0 0.0
    %v536 = vand.u32 %v99, 4294901760
    %v537 = vsub.f32 %v99, %v536
    %v538 = vand.u32 %v537, 4294901760
    %539 = vmatpush1.msra.mxu0 %v538
    %540 = vmatprep.subr.mxu0 0.0
    %v541 = vand.u32 %v98, 4294901760
    %v542 = vsub.f32 %v98, %v541
    %v543 = vand.u32 %v542, 4294901760
    %544 = vmatpush1.msra.mxu0 %v543
    %545 = vmatprep.subr.mxu0 0.0
    %v546 = vand.u32 %v97, 4294901760
    %v547 = vsub.f32 %v97, %v546
    %v548 = vand.u32 %v547, 4294901760
    %549 = vmatpush1.msra.mxu0 %v548
    %550 = vmatprep.subr.mxu0 0.0
    %v551 = vand.u32 %v96, 4294901760
    %v552 = vsub.f32 %v96, %v551
    %v553 = vand.u32 %v552, 4294901760
    %554 = vmatpush1.msra.mxu0 %v553
    %555 = vmatprep.subr.mxu0 0.0
    %v556 = vand.u32 %v95, 4294901760
    %v557 = vsub.f32 %v95, %v556
    %v558 = vand.u32 %v557, 4294901760
    %559 = vmatpush1.msra.mxu0 %v558
    %560 = vmatprep.subr.mxu0 0.0
    %v561 = vand.u32 %v94, 4294901760
    %v562 = vsub.f32 %v94, %v561
    %v563 = vand.u32 %v562, 4294901760
    %564 = vmatpush1.msra.mxu0 %v563
    %565 = vmatprep.subr.mxu0 0.0
    %v566 = vand.u32 %v93, 4294901760
    %v567 = vsub.f32 %v93, %v566
    %v568 = vand.u32 %v567, 4294901760
    %569 = vmatpush1.msra.mxu0 %v568
    %570 = vmatprep.subr.mxu0 0.0
    %v571 = vand.u32 %v92, 4294901760
    %v572 = vsub.f32 %v92, %v571
    %v573 = vand.u32 %v572, 4294901760
    %574 = vmatpush1.msra.mxu0 %v573
    %575 = vmatprep.subr.mxu0 0.0
    %v576 = vand.u32 %v91, 4294901760
    %v577 = vsub.f32 %v91, %v576
    %v578 = vand.u32 %v577, 4294901760
    %579 = vmatpush1.msra.mxu0 %v578
    %580 = vmatprep.subr.mxu0 0.0
    %v581 = vand.u32 %v90, 4294901760
    %v582 = vsub.f32 %v90, %v581
    %v583 = vand.u32 %v582, 4294901760
    %584 = vmatpush1.msra.mxu0 %v583
    %585 = vmatprep.subr.mxu0 0.0
    %v586 = vand.u32 %v89, 4294901760
    %v587 = vsub.f32 %v89, %v586
    %v588 = vand.u32 %v587, 4294901760
    %589 = vmatpush1.msra.mxu0 %v588
    %590 = vmatprep.subr.mxu0 0.0
    %v591 = vand.u32 %v88, 4294901760
    %v592 = vsub.f32 %v88, %v591
    %v593 = vand.u32 %v592, 4294901760
    %594 = vmatpush1.msra.mxu0 %v593
    %595 = vmatprep.subr.mxu0 0.0
    %v596 = vand.u32 %v87, 4294901760
    %v597 = vsub.f32 %v87, %v596
    %v598 = vand.u32 %v597, 4294901760
    %599 = vmatpush1.msra.mxu0 %v598
    %600 = vmatprep.subr.mxu0 0.0
    %v601 = vand.u32 %v86, 4294901760
    %v602 = vsub.f32 %v86, %v601
    %v603 = vand.u32 %v602, 4294901760
    %604 = vmatpush1.msra.mxu0 %v603
    %605 = vmatprep.subr.mxu0 0.0
    %v606 = vand.u32 %v85, 4294901760
    %v607 = vsub.f32 %v85, %v606
    %v608 = vand.u32 %v607, 4294901760
    %609 = vmatpush1.msra.mxu0 %v608
    %610 = vmatprep.subr.mxu0 0.0
    %v611 = vand.u32 %v84, 4294901760
    %v612 = vsub.f32 %v84, %v611
    %v613 = vand.u32 %v612, 4294901760
    %614 = vmatpush1.msra.mxu0 %v613
    %615 = vmatprep.subr.mxu0 0.0
    %616 = vmatpush2.msra.mxu0 0.0
    %617 = vmatprep.subr.mxu0 0.0
    %618 = vmatpush2.msra.mxu0 0.0
    %619 = vmatprep.subr.mxu0 0.0
    %620 = vmatpush2.msra.mxu0 0.0
    %621 = vmatprep.subr.mxu0 0.0
    %622 = vmatpush2.msra.mxu0 0.0
    %623 = vmatprep.subr.mxu0 0.0
    %624 = vmatpush2.msra.mxu0 0.0
    %625 = vmatprep.subr.mxu0 0.0
    %626 = vmatpush2.msra.mxu0 0.0
    %627 = vmatprep.subr.mxu0 0.0
    %628 = vmatpush2.msra.mxu0 0.0
    %629 = vmatprep.subr.mxu0 0.0
    %630 = vmatpush2.msra.mxu0 0.0
    %631 = vmatprep.subr.mxu0 0.0
    %632 = vmatpush2.msra.mxu0 0.0
    %633 = vmatprep.subr.mxu0 0.0
    %634 = vmatpush2.msra.mxu0 0.0
    %635 = vmatprep.subr.mxu0 0.0
    %636 = vmatpush2.msra.mxu0 0.0
    %637 = vmatprep.subr.mxu0 0.0
    %638 = vmatpush2.msra.mxu0 0.0
    %639 = vmatprep.subr.mxu0 0.0
    %640 = vmatpush2.msra.mxu0 0.0
    %641 = vmatprep.subr.mxu0 0.0
    %642 = vmatpush2.msra.mxu0 0.0
    %643 = vmatprep.subr.mxu0 0.0
    %644 = vmatpush2.msra.mxu0 0.0
    %645 = vmatprep.subr.mxu0 0.0
    %646 = vmatpush2.msra.mxu0 0.0
    %647 = vmatprep.mubr.f32.mxu0 0.0
    %v648 = vand.u32 %v83, 4294901760
    %649 = vmatmul.mubr.f32.gmra.mxu0 %v648
    %v650 = vpop.f32.mrf.mxu0
    %v651 = vadd.f32 %v532, %v650
    %v652 = vpop.f32.mrf.mxu0
    %653 = vdwg.mxu0
    %654 = vmatprep.subr.mxu0 0.0
    %v655 = vand.u32 %v99, 4294901760
    %656 = vmatpush1.msra.mxu0 %v655
    %657 = vmatprep.subr.mxu0 0.0
    %v658 = vand.u32 %v98, 4294901760
    %659 = vmatpush1.msra.mxu0 %v658
    %660 = vmatprep.subr.mxu0 0.0
    %v661 = vand.u32 %v97, 4294901760
    %662 = vmatpush1.msra.mxu0 %v661
    %663 = vmatprep.subr.mxu0 0.0
    %v664 = vand.u32 %v96, 4294901760
    %665 = vmatpush1.msra.mxu0 %v664
    %666 = vmatprep.subr.mxu0 0.0
    %v667 = vand.u32 %v95, 4294901760
    %668 = vmatpush1.msra.mxu0 %v667
    %669 = vmatprep.subr.mxu0 0.0
    %v670 = vand.u32 %v94, 4294901760
    %671 = vmatpush1.msra.mxu0 %v670
    %672 = vmatprep.subr.mxu0 0.0
    %v673 = vand.u32 %v93, 4294901760
    %674 = vmatpush1.msra.mxu0 %v673
    %675 = vmatprep.subr.mxu0 0.0
    %v676 = vand.u32 %v92, 4294901760
    %677 = vmatpush1.msra.mxu0 %v676
    %678 = vmatprep.subr.mxu0 0.0
    %v679 = vand.u32 %v91, 4294901760
    %680 = vmatpush1.msra.mxu0 %v679
    %681 = vmatprep.subr.mxu0 0.0
    %v682 = vand.u32 %v90, 4294901760
    %683 = vmatpush1.msra.mxu0 %v682
    %684 = vmatprep.subr.mxu0 0.0
    %v685 = vand.u32 %v89, 4294901760
    %686 = vmatpush1.msra.mxu0 %v685
    %687 = vmatprep.subr.mxu0 0.0
    %v688 = vand.u32 %v88, 4294901760
    %689 = vmatpush1.msra.mxu0 %v688
    %690 = vmatprep.subr.mxu0 0.0
    %v691 = vand.u32 %v87, 4294901760
    %692 = vmatpush1.msra.mxu0 %v691
    %693 = vmatprep.subr.mxu0 0.0
    %v694 = vand.u32 %v86, 4294901760
    %695 = vmatpush1.msra.mxu0 %v694
    %696 = vmatprep.subr.mxu0 0.0
    %v697 = vand.u32 %v85, 4294901760
    %698 = vmatpush1.msra.mxu0 %v697
    %699 = vmatprep.subr.mxu0 0.0
    %v700 = vand.u32 %v84, 4294901760
    %701 = vmatpush1.msra.mxu0 %v700
    %702 = vmatprep.subr.mxu0 0.0
    %703 = vmatpush2.msra.mxu0 0.0
    %704 = vmatprep.subr.mxu0 0.0
    %705 = vmatpush2.msra.mxu0 0.0
    %706 = vmatprep.subr.mxu0 0.0
    %707 = vmatpush2.msra.mxu0 0.0
    %708 = vmatprep.subr.mxu0 0.0
    %709 = vmatpush2.msra.mxu0 0.0
    %710 = vmatprep.subr.mxu0 0.0
    %711 = vmatpush2.msra.mxu0 0.0
    %712 = vmatprep.subr.mxu0 0.0
    %713 = vmatpush2.msra.mxu0 0.0
    %714 = vmatprep.subr.mxu0 0.0
    %715 = vmatpush2.msra.mxu0 0.0
    %716 = vmatprep.subr.mxu0 0.0
    %717 = vmatpush2.msra.mxu0 0.0
    %718 = vmatprep.subr.mxu0 0.0
    %719 = vmatpush2.msra.mxu0 0.0
    %720 = vmatprep.subr.mxu0 0.0
    %721 = vmatpush2.msra.mxu0 0.0
    %722 = vmatprep.subr.mxu0 0.0
    %723 = vmatpush2.msra.mxu0 0.0
    %724 = vmatprep.subr.mxu0 0.0
    %725 = vmatpush2.msra.mxu0 0.0
    %726 = vmatprep.subr.mxu0 0.0
    %727 = vmatpush2.msra.mxu0 0.0
    %728 = vmatprep.subr.mxu0 0.0
    %729 = vmatpush2.msra.mxu0 0.0
    %730 = vmatprep.subr.mxu0 0.0
    %731 = vmatpush2.msra.mxu0 0.0
    %732 = vmatprep.subr.mxu0 0.0
    %733 = vmatpush2.msra.mxu0 0.0
    %734 = vmatprep.mubr.f32.mxu0 0.0
    %v735 = vand.u32 %v83, 4294901760
    %736 = vmatmul.mubr.f32.gmra.mxu0 %v735
    %v737 = vpop.f32.mrf.mxu0
    %v738 = vadd.f32 %v651, %v737
    %v739 = vpop.f32.mrf.mxu0
    %740 = vdwg.mxu0
    %v741 = vld [vmem:[#allocation5] sm:$0xff]
    %v742 = vadd.f32 %v738, %v741
    %v743 = vfloor.f32 %v738
    %v744 = vsub.f32 %v738, %v743
    %v745 = vadd.f32 %v742, 0.5
    %v746 = vfloor.f32 %v745
    %v747 = vsub.f32 %v742, %v746
    %v748 = vmul.f32 %v747, %v747
    %v749 = vmul.f32 %v748, -0.007370431
    %v750 = vadd.f32 %v749, 0.082145885
    %v751 = vmul.f32 %v750, %v748
    %v752 = vadd.f32 %v751, -0.5992645
    %v753 = vmul.f32 %v752, %v748
    %v754 = vadd.f32 %v753, 2.550164
    %v755 = vmul.f32 %v754, %v748
    %v756 = vadd.f32 %v755, -5.1677127
    %v757 = vmul.f32 %v756, %v748
    %v758 = vadd.f32 %v757, 3.1415927
    %v759 = vmul.f32 %v747, %v758
    %v760 = vmul.f32 %v748, 0.0019295743
    %v761 = vadd.f32 %v760, -0.02580689
    %v762 = vmul.f32 %v761, %v748
    %v763 = vadd.f32 %v762, 0.23533063
    %v764 = vmul.f32 %v763, %v748
    %v765 = vadd.f32 %v764, -1.3352628
    %v766 = vmul.f32 %v765, %v748
    %v767 = vadd.f32 %v766, 4.058712
    %v768 = vmul.f32 %v767, %v748
    %v769 = vadd.f32 %v768, -4.934802
    %v770 = vmul.f32 %v769, %v748
    %v771 = vadd.f32 %v770, 1.0
    %v772 = vmul.f32 %v759, 2.0
    %v773 = vmul.f32 %v772, %v771
    %v774 = vmul.f32 %v772, %v759
    %v775 = vsub.f32 1.0, %v774
    %vm776 = vcmp.ge.f32.partialorder %v83, 0.5
    %v777 = vsel %vm776, 0.0, 1.0
    %779 = vset.pattern.permute.xlu0 0
    %780 = vperm.xlu0 %779, %v82
    %v781 = vpop.permute.xlu0 %780
    %v783 = vmul.f32 %v773, %v781
    %785 = vset.pattern.permute.xlu0 0
    %786 = vperm.xlu0 %785, %v81
    %v787 = vpop.permute.xlu0 %786
    %v789 = vmul.f32 %v775, %v787
    %v790 = vadd.f32 %v783, %v789
    %v791 = vmul.f32 %v790, %v777
    %v792 = vadd.f32 %v791, 0.0
    %v793 = vmul.f32 %v773, %v775
    %v794 = vadd.f32 %v793, %v793
    %v795 = vmul.f32 %v775, %v775
    %v796 = vmul.f32 %v773, %v773
    %v797 = vsub.f32 %v795, %v796
    %vm798 = vcmp.ge.f32.partialorder %v83, 0.25
    %v799 = vsel %vm798, 0.0, 0.5
    %800 = vset.pattern.permute.xlu0 1
    %801 = vperm.xlu0 %800, %v82
    %v802 = vpop.permute.xlu0 %801
    %v804 = vmul.f32 %v794, %v802
    %805 = vset.pattern.permute.xlu0 1
    %806 = vperm.xlu0 %805, %v81
    %v807 = vpop.permute.xlu0 %806
    %v809 = vmul.f32 %v797, %v807
    %v810 = vadd.f32 %v804, %v809
    %v811 = vmul.f32 %v810, %v799
    %v812 = vadd.f32 %v792, %v811
    %v813 = vmul.f32 %v794, %v775
    %v814 = vmul.f32 %v797, %v773
    %v815 = vadd.f32 %v813, %v814
    %v816 = vmul.f32 %v797, %v775
    %v817 = vmul.f32 %v794, %v773
    %v818 = vsub.f32 %v816, %v817
    %vm819 = vcmp.ge.f32.partialorder %v83, 0.16666667
    %v820 = vsel %vm819, 0.0, 0.33333334
    %821 = vset.pattern.permute.xlu0 2
    %822 = vperm.xlu0 %821, %v82
    %v823 = vpop.permute.xlu0 %822
    %v825 = vmul.f32 %v815, %v823
    %826 = vset.pattern.permute.xlu0 2
    %827 = vperm.xlu0 %826, %v81
    %v828 = vpop.permute.xlu0 %827
    %v830 = vmul.f32 %v818, %v828
    %v831 = vadd.f32 %v825, %v830
    %v832 = vmul.f32 %v831, %v820
    %v833 = vadd.f32 %v812, %v832
    %v834 = vmul.f32 %v815, %v775
    %v835 = vmul.f32 %v818, %v773
    %v836 = vadd.f32 %v834, %v835
    %v837 = vmul.f32 %v818, %v775
    %v838 = vmul.f32 %v815, %v773
    %v839 = vsub.f32 %v837, %v838
    %vm840 = vcmp.ge.f32.partialorder %v83, 0.125
    %v841 = vsel %vm840, 0.0, 0.25
    %842 = vset.pattern.permute.xlu0 3
    %843 = vperm.xlu0 %842, %v82
    %v844 = vpop.permute.xlu0 %843
    %v846 = vmul.f32 %v836, %v844
    %847 = vset.pattern.permute.xlu0 3
    %848 = vperm.xlu0 %847, %v81
    %v849 = vpop.permute.xlu0 %848
    %v851 = vmul.f32 %v839, %v849
    %v852 = vadd.f32 %v846, %v851
    %v853 = vmul.f32 %v852, %v841
    %v854 = vadd.f32 %v833, %v853
    %v855 = vmul.f32 %v836, %v775
    %v856 = vmul.f32 %v839, %v773
    %v857 = vadd.f32 %v855, %v856
    %v858 = vmul.f32 %v839, %v775
    %v859 = vmul.f32 %v836, %v773
    %v860 = vsub.f32 %v858, %v859
    %vm861 = vcmp.ge.f32.partialorder %v83, 0.1
    %v862 = vsel %vm861, 0.0, 0.2
    %863 = vset.pattern.permute.xlu0 4
    %864 = vperm.xlu0 %863, %v82
    %v865 = vpop.permute.xlu0 %864
    %v867 = vmul.f32 %v857, %v865
    %868 = vset.pattern.permute.xlu0 4
    %869 = vperm.xlu0 %868, %v81
    %v870 = vpop.permute.xlu0 %869
    %v872 = vmul.f32 %v860, %v870
    %v873 = vadd.f32 %v867, %v872
    %v874 = vmul.f32 %v873, %v862
    %v875 = vadd.f32 %v854, %v874
    %v876 = vmul.f32 %v857, %v775
    %v877 = vmul.f32 %v860, %v773
    %v878 = vadd.f32 %v876, %v877
    %v879 = vmul.f32 %v860, %v775
    %v880 = vmul.f32 %v857, %v773
    %v881 = vsub.f32 %v879, %v880
    %vm882 = vcmp.ge.f32.partialorder %v83, 0.083333336
    %v883 = vsel %vm882, 0.0, 0.16666667
    %884 = vset.pattern.permute.xlu0 5
    %885 = vperm.xlu0 %884, %v82
    %v886 = vpop.permute.xlu0 %885
    %v888 = vmul.f32 %v878, %v886
    %889 = vset.pattern.permute.xlu0 5
    %890 = vperm.xlu0 %889, %v81
    %v891 = vpop.permute.xlu0 %890
    %v893 = vmul.f32 %v881, %v891
    %v894 = vadd.f32 %v888, %v893
    %v895 = vmul.f32 %v894, %v883
    %v896 = vadd.f32 %v875, %v895
    %v897 = vmul.f32 %v878, %v775
    %v898 = vmul.f32 %v881, %v773
    %v899 = vadd.f32 %v897, %v898
    %v900 = vmul.f32 %v881, %v775
    %v901 = vmul.f32 %v878, %v773
    %v902 = vsub.f32 %v900, %v901
    %vm903 = vcmp.ge.f32.partialorder %v83, 0.071428575
    %v904 = vsel %vm903, 0.0, 0.14285715
    %905 = vset.pattern.permute.xlu0 6
    %906 = vperm.xlu0 %905, %v82
    %v907 = vpop.permute.xlu0 %906
    %v909 = vmul.f32 %v899, %v907
    %910 = vset.pattern.permute.xlu0 6
    %911 = vperm.xlu0 %910, %v81
    %v912 = vpop.permute.xlu0 %911
    %v914 = vmul.f32 %v902, %v912
    %v915 = vadd.f32 %v909, %v914
    %v916 = vmul.f32 %v915, %v904
    %v917 = vadd.f32 %v896, %v916
    %v918 = vmul.f32 %v899, %v775
    %v919 = vmul.f32 %v902, %v773
    %v920 = vadd.f32 %v918, %v919
    %v921 = vmul.f32 %v902, %v775
    %v922 = vmul.f32 %v899, %v773
    %v923 = vsub.f32 %v921, %v922
    %vm924 = vcmp.ge.f32.partialorder %v83, 0.0625
    %v925 = vsel %vm924, 0.0, 0.125
    %926 = vset.pattern.permute.xlu0 7
    %927 = vperm.xlu0 %926, %v82
    %v928 = vpop.permute.xlu0 %927
    %v930 = vmul.f32 %v920, %v928
    %931 = vset.pattern.permute.xlu0 7
    %932 = vperm.xlu0 %931, %v81
    %v933 = vpop.permute.xlu0 %932
    %v935 = vmul.f32 %v923, %v933
    %v936 = vadd.f32 %v930, %v935
    %v937 = vmul.f32 %v936, %v925
    %v938 = vadd.f32 %v917, %v937
    %939 = vst [vmem:[#allocation11] sm:$0xff] %v938
    %v940 = vld [vmem:[#allocation2 + $0x8] sm:$0xff]
    %v941 = vld [vmem:[#allocation10] sm:$0xff]
    %v942 = vld [vmem:[#allocation10 + $0x8] sm:$0xff]
    %v943 = vld [vmem:[#allocation10 + $0x10] sm:$0xff]
    %v944 = vld [vmem:[#allocation10 + $0x18] sm:$0xff]
    %v945 = vld [vmem:[#allocation10 + $0x20] sm:$0xff]
    %v946 = vld [vmem:[#allocation10 + $0x28] sm:$0xff]
    %v947 = vld [vmem:[#allocation10 + $0x30] sm:$0xff]
    %v948 = vld [vmem:[#allocation10 + $0x38] sm:$0xff]
    %v949 = vld [vmem:[#allocation10 + $0x40] sm:$0xff]
    %v950 = vld [vmem:[#allocation10 + $0x48] sm:$0xff]
    %v951 = vld [vmem:[#allocation10 + $0x50] sm:$0xff]
    %v952 = vld [vmem:[#allocation10 + $0x58] sm:$0xff]
    %v953 = vld [vmem:[#allocation10 + $0x60] sm:$0xff]
    %v954 = vld [vmem:[#allocation10 + $0x68] sm:$0xff]
    %v955 = vld [vmem:[#allocation10 + $0x70] sm:$0xff]
    %v956 = vld [vmem:[#allocation10 + $0x78] sm:$0xff]
    %957 = vmatprep.subr.mxu0 0.0
    %v958 = vand.u32 %v956, 4294901760
    %959 = vmatpush1.msra.mxu0 %v958
    %960 = vmatprep.subr.mxu0 0.0
    %v961 = vand.u32 %v955, 4294901760
    %962 = vmatpush1.msra.mxu0 %v961
    %963 = vmatprep.subr.mxu0 0.0
    %v964 = vand.u32 %v954, 4294901760
    %965 = vmatpush1.msra.mxu0 %v964
    %966 = vmatprep.subr.mxu0 0.0
    %v967 = vand.u32 %v953, 4294901760
    %968 = vmatpush1.msra.mxu0 %v967
    %969 = vmatprep.subr.mxu0 0.0
    %v970 = vand.u32 %v952, 4294901760
    %971 = vmatpush1.msra.mxu0 %v970
    %972 = vmatprep.subr.mxu0 0.0
    %v973 = vand.u32 %v951, 4294901760
    %974 = vmatpush1.msra.mxu0 %v973
    %975 = vmatprep.subr.mxu0 0.0
    %v976 = vand.u32 %v950, 4294901760
    %977 = vmatpush1.msra.mxu0 %v976
    %978 = vmatprep.subr.mxu0 0.0
    %v979 = vand.u32 %v949, 4294901760
    %980 = vmatpush1.msra.mxu0 %v979
    %981 = vmatprep.subr.mxu0 0.0
    %v982 = vand.u32 %v948, 4294901760
    %983 = vmatpush1.msra.mxu0 %v982
    %984 = vmatprep.subr.mxu0 0.0
    %v985 = vand.u32 %v947, 4294901760
    %986 = vmatpush1.msra.mxu0 %v985
    %987 = vmatprep.subr.mxu0 0.0
    %v988 = vand.u32 %v946, 4294901760
    %989 = vmatpush1.msra.mxu0 %v988
    %990 = vmatprep.subr.mxu0 0.0
    %v991 = vand.u32 %v945, 4294901760
    %992 = vmatpush1.msra.mxu0 %v991
    %993 = vmatprep.subr.mxu0 0.0
    %v994 = vand.u32 %v944, 4294901760
    %995 = vmatpush1.msra.mxu0 %v994
    %996 = vmatprep.subr.mxu0 0.0
    %v997 = vand.u32 %v943, 4294901760
    %998 = vmatpush1.msra.mxu0 %v997
    %999 = vmatprep.subr.mxu0 0.0
    %v1000 = vand.u32 %v942, 4294901760
    %1001 = vmatpush1.msra.mxu0 %v1000
    %1002 = vmatprep.subr.mxu0 0.0
    %v1003 = vand.u32 %v941, 4294901760
    %1004 = vmatpush1.msra.mxu0 %v1003
    %1005 = vmatprep.subr.mxu0 0.0
    %1006 = vmatpush2.msra.mxu0 0.0
    %1007 = vmatprep.subr.mxu0 0.0
    %1008 = vmatpush2.msra.mxu0 0.0
    %1009 = vmatprep.subr.mxu0 0.0
    %1010 = vmatpush2.msra.mxu0 0.0
    %1011 = vmatprep.subr.mxu0 0.0
    %1012 = vmatpush2.msra.mxu0 0.0
    %1013 = vmatprep.subr.mxu0 0.0
    %1014 = vmatpush2.msra.mxu0 0.0
    %1015 = vmatprep.subr.mxu0 0.0
    %1016 = vmatpush2.msra.mxu0 0.0
    %1017 = vmatprep.subr.mxu0 0.0
    %1018 = vmatpush2.msra.mxu0 0.0
    %1019 = vmatprep.subr.mxu0 0.0
    %1020 = vmatpush2.msra.mxu0 0.0
    %1021 = vmatprep.subr.mxu0 0.0
    %1022 = vmatpush2.msra.mxu0 0.0
    %1023 = vmatprep.subr.mxu0 0.0
    %1024 = vmatpush2.msra.mxu0 0.0
    %1025 = vmatprep.subr.mxu0 0.0
    %1026 = vmatpush2.msra.mxu0 0.0
    %1027 = vmatprep.subr.mxu0 0.0
    %1028 = vmatpush2.msra.mxu0 0.0
    %1029 = vmatprep.subr.mxu0 0.0
    %1030 = vmatpush2.msra.mxu0 0.0
    %1031 = vmatprep.subr.mxu0 0.0
    %1032 = vmatpush2.msra.mxu0 0.0
    %1033 = vmatprep.subr.mxu0 0.0
    %1034 = vmatpush2.msra.mxu0 0.0
    %1035 = vmatprep.subr.mxu0 0.0
    %1036 = vmatpush2.msra.mxu0 0.0
    %1037 = vmatprep.mubr.f32.mxu0 0.0
    %v1038 = vand.u32 %v940, 4294901760
    %v1039 = vsub.f32 %v940, %v1038
    %v1040 = vand.u32 %v1039, 4294901760
    %v1041 = vsub.f32 %v1039, %v1040
    %v1042 = vand.u32 %v1041, 4294901760
    %1043 = vmatmul.mubr.f32.gmra.mxu0 %v1042
    %v1044 = vpop.f32.mrf.mxu0
    %v1045 = vadd.f32 0.0, %v1044
    %v1046 = vpop.f32.mrf.mxu0
    %1047 = vdwg.mxu0
    %1048 = vmatprep.subr.mxu0 0.0
    %v1049 = vand.u32 %v956, 4294901760
    %v1050 = vsub.f32 %v956, %v1049
    %v1051 = vand.u32 %v1050, 4294901760
    %v1052 = vsub.f32 %v1050, %v1051
    %v1053 = vand.u32 %v1052, 4294901760
    %1054 = vmatpush1.msra.mxu0 %v1053
    %1055 = vmatprep.subr.mxu0 0.0
    %v1056 = vand.u32 %v955, 4294901760
    %v1057 = vsub.f32 %v955, %v1056
    %v1058 = vand.u32 %v1057, 4294901760
    %v1059 = vsub.f32 %v1057, %v1058
    %v1060 = vand.u32 %v1059, 4294901760
    %1061 = vmatpush1.msra.mxu0 %v1060
    %1062 = vmatprep.subr.mxu0 0.0
    %v1063 = vand.u32 %v954, 4294901760
    %v1064 = vsub.f32 %v954, %v1063
    %v1065 = vand.u32 %v1064, 4294901760
    %v1066 = vsub.f32 %v1064, %v1065
    %v1067 = vand.u32 %v1066, 4294901760
    %1068 = vmatpush1.msra.mxu0 %v1067
    %1069 = vmatprep.subr.mxu0 0.0
    %v1070 = vand.u32 %v953, 4294901760
    %v1071 = vsub.f32 %v953, %v1070
    %v1072 = vand.u32 %v1071, 4294901760
    %v1073 = vsub.f32 %v1071, %v1072
    %v1074 = vand.u32 %v1073, 4294901760
    %1075 = vmatpush1.msra.mxu0 %v1074
    %1076 = vmatprep.subr.mxu0 0.0
    %v1077 = vand.u32 %v952, 4294901760
    %v1078 = vsub.f32 %v952, %v1077
    %v1079 = vand.u32 %v1078, 4294901760
    %v1080 = vsub.f32 %v1078, %v1079
    %v1081 = vand.u32 %v1080, 4294901760
    %1082 = vmatpush1.msra.mxu0 %v1081
    %1083 = vmatprep.subr.mxu0 0.0
    %v1084 = vand.u32 %v951, 4294901760
    %v1085 = vsub.f32 %v951, %v1084
    %v1086 = vand.u32 %v1085, 4294901760
    %v1087 = vsub.f32 %v1085, %v1086
    %v1088 = vand.u32 %v1087, 4294901760
    %1089 = vmatpush1.msra.mxu0 %v1088
    %1090 = vmatprep.subr.mxu0 0.0
    %v1091 = vand.u32 %v950, 4294901760
    %v1092 = vsub.f32 %v950, %v1091
    %v1093 = vand.u32 %v1092, 4294901760
    %v1094 = vsub.f32 %v1092, %v1093
    %v1095 = vand.u32 %v1094, 4294901760
    %1096 = vmatpush1.msra.mxu0 %v1095
    %1097 = vmatprep.subr.mxu0 0.0
    %v1098 = vand.u32 %v949, 4294901760
    %v1099 = vsub.f32 %v949, %v1098
    %v1100 = vand.u32 %v1099, 4294901760
    %v1101 = vsub.f32 %v1099, %v1100
    %v1102 = vand.u32 %v1101, 4294901760
    %1103 = vmatpush1.msra.mxu0 %v1102
    %1104 = vmatprep.subr.mxu0 0.0
    %v1105 = vand.u32 %v948, 4294901760
    %v1106 = vsub.f32 %v948, %v1105
    %v1107 = vand.u32 %v1106, 4294901760
    %v1108 = vsub.f32 %v1106, %v1107
    %v1109 = vand.u32 %v1108, 4294901760
    %1110 = vmatpush1.msra.mxu0 %v1109
    %1111 = vmatprep.subr.mxu0 0.0
    %v1112 = vand.u32 %v947, 4294901760
    %v1113 = vsub.f32 %v947, %v1112
    %v1114 = vand.u32 %v1113, 4294901760
    %v1115 = vsub.f32 %v1113, %v1114
    %v1116 = vand.u32 %v1115, 4294901760
    %1117 = vmatpush1.msra.mxu0 %v1116
    %1118 = vmatprep.subr.mxu0 0.0
    %v1119 = vand.u32 %v946, 4294901760
    %v1120 = vsub.f32 %v946, %v1119
    %v1121 = vand.u32 %v1120, 4294901760
    %v1122 = vsub.f32 %v1120, %v1121
    %v1123 = vand.u32 %v1122, 4294901760
    %1124 = vmatpush1.msra.mxu0 %v1123
    %1125 = vmatprep.subr.mxu0 0.0
    %v1126 = vand.u32 %v945, 4294901760
    %v1127 = vsub.f32 %v945, %v1126
    %v1128 = vand.u32 %v1127, 4294901760
    %v1129 = vsub.f32 %v1127, %v1128
    %v1130 = vand.u32 %v1129, 4294901760
    %1131 = vmatpush1.msra.mxu0 %v1130
    %1132 = vmatprep.subr.mxu0 0.0
    %v1133 = vand.u32 %v944, 4294901760
    %v1134 = vsub.f32 %v944, %v1133
    %v1135 = vand.u32 %v1134, 4294901760
    %v1136 = vsub.f32 %v1134, %v1135
    %v1137 = vand.u32 %v1136, 4294901760
    %1138 = vmatpush1.msra.mxu0 %v1137
    %1139 = vmatprep.subr.mxu0 0.0
    %v1140 = vand.u32 %v943, 4294901760
    %v1141 = vsub.f32 %v943, %v1140
    %v1142 = vand.u32 %v1141, 4294901760
    %v1143 = vsub.f32 %v1141, %v1142
    %v1144 = vand.u32 %v1143, 4294901760
    %1145 = vmatpush1.msra.mxu0 %v1144
    %1146 = vmatprep.subr.mxu0 0.0
    %v1147 = vand.u32 %v942, 4294901760
    %v1148 = vsub.f32 %v942, %v1147
    %v1149 = vand.u32 %v1148, 4294901760
    %v1150 = vsub.f32 %v1148, %v1149
    %v1151 = vand.u32 %v1150, 4294901760
    %1152 = vmatpush1.msra.mxu0 %v1151
    %1153 = vmatprep.subr.mxu0 0.0
    %v1154 = vand.u32 %v941, 4294901760
    %v1155 = vsub.f32 %v941, %v1154
    %v1156 = vand.u32 %v1155, 4294901760
    %v1157 = vsub.f32 %v1155, %v1156
    %v1158 = vand.u32 %v1157, 4294901760
    %1159 = vmatpush1.msra.mxu0 %v1158
    %1160 = vmatprep.subr.mxu0 0.0
    %1161 = vmatpush2.msra.mxu0 0.0
    %1162 = vmatprep.subr.mxu0 0.0
    %1163 = vmatpush2.msra.mxu0 0.0
    %1164 = vmatprep.subr.mxu0 0.0
    %1165 = vmatpush2.msra.mxu0 0.0
    %1166 = vmatprep.subr.mxu0 0.0
    %1167 = vmatpush2.msra.mxu0 0.0
    %1168 = vmatprep.subr.mxu0 0.0
    %1169 = vmatpush2.msra.mxu0 0.0
    %1170 = vmatprep.subr.mxu0 0.0
    %1171 = vmatpush2.msra.mxu0 0.0
    %1172 = vmatprep.subr.mxu0 0.0
    %1173 = vmatpush2.msra.mxu0 0.0
    %1174 = vmatprep.subr.mxu0 0.0
    %1175 = vmatpush2.msra.mxu0 0.0
    %1176 = vmatprep.subr.mxu0 0.0
    %1177 = vmatpush2.msra.mxu0 0.0
    %1178 = vmatprep.subr.mxu0 0.0
    %1179 = vmatpush2.msra.mxu0 0.0
    %1180 = vmatprep.subr.mxu0 0.0
    %1181 = vmatpush2.msra.mxu0 0.0
    %1182 = vmatprep.subr.mxu0 0.0
    %1183 = vmatpush2.msra.mxu0 0.0
    %1184 = vmatprep.subr.mxu0 0.0
    %1185 = vmatpush2.msra.mxu0 0.0
    %1186 = vmatprep.subr.mxu0 0.0
    %1187 = vmatpush2.msra.mxu0 0.0
    %1188 = vmatprep.subr.mxu0 0.0
    %1189 = vmatpush2.msra.mxu0 0.0
    %1190 = vmatprep.subr.mxu0 0.0
    %1191 = vmatpush2.msra.mxu0 0.0
    %1192 = vmatprep.mubr.f32.mxu0 0.0
    %v1193 = vand.u32 %v940, 4294901760
    %1194 = vmatmul.mubr.f32.gmra.mxu0 %v1193
    %v1195 = vpop.f32.mrf.mxu0
    %v1196 = vadd.f32 %v1045, %v1195
    %v1197 = vpop.f32.mrf.mxu0
    %1198 = vdwg.mxu0
    %1199 = vmatprep.subr.mxu0 0.0
    %v1200 = vand.u32 %v956, 4294901760
    %v1201 = vsub.f32 %v956, %v1200
    %1202 = vmatpush1.msra.mxu0 %v1201
    %1203 = vmatprep.subr.mxu0 0.0
    %v1204 = vand.u32 %v955, 4294901760
    %v1205 = vsub.f32 %v955, %v1204
    %1206 = vmatpush1.msra.mxu0 %v1205
    %1207 = vmatprep.subr.mxu0 0.0
    %v1208 = vand.u32 %v954, 4294901760
    %v1209 = vsub.f32 %v954, %v1208
    %1210 = vmatpush1.msra.mxu0 %v1209
    %1211 = vmatprep.subr.mxu0 0.0
    %v1212 = vand.u32 %v953, 4294901760
    %v1213 = vsub.f32 %v953, %v1212
    %1214 = vmatpush1.msra.mxu0 %v1213
    %1215 = vmatprep.subr.mxu0 0.0
    %v1216 = vand.u32 %v952, 4294901760
    %v1217 = vsub.f32 %v952, %v1216
    %1218 = vmatpush1.msra.mxu0 %v1217
    %1219 = vmatprep.subr.mxu0 0.0
    %v1220 = vand.u32 %v951, 4294901760
    %v1221 = vsub.f32 %v951, %v1220
    %1222 = vmatpush1.msra.mxu0 %v1221
    %1223 = vmatprep.subr.mxu0 0.0
    %v1224 = vand.u32 %v950, 4294901760
    %v1225 = vsub.f32 %v950, %v1224
    %1226 = vmatpush1.msra.mxu0 %v1225
    %1227 = vmatprep.subr.mxu0 0.0
    %v1228 = vand.u32 %v949, 4294901760
    %v1229 = vsub.f32 %v949, %v1228
    %1230 = vmatpush1.msra.mxu0 %v1229
    %1231 = vmatprep.subr.mxu0 0.0
    %v1232 = vand.u32 %v948, 4294901760
    %v1233 = vsub.f32 %v948, %v1232
    %1234 = vmatpush1.msra.mxu0 %v1233
    %1235 = vmatprep.subr.mxu0 0.0
    %v1236 = vand.u32 %v947, 4294901760
    %v1237 = vsub.f32 %v947, %v1236
    %1238 = vmatpush1.msra.mxu0 %v1237
    %1239 = vmatprep.subr.mxu0 0.0
    %v1240 = vand.u32 %v946, 4294901760
    %v1241 = vsub.f32 %v946, %v1240
    %1242 = vmatpush1.msra.mxu0 %v1241
    %1243 = vmatprep.subr.mxu0 0.0
    %v1244 = vand.u32 %v945, 4294901760
    %v1245 = vsub.f32 %v945, %v1244
    %1246 = vmatpush1.msra.mxu0 %v1245
    %1247 = vmatprep.subr.mxu0 0.0
    %v1248 = vand.u32 %v944, 4294901760
    %v1249 = vsub.f32 %v944, %v1248
    %1250 = vmatpush1.msra.mxu0 %v1249
    %1251 = vmatprep.subr.mxu0 0.0
    %v1252 = vand.u32 %v943, 4294901760
    %v1253 = vsub.f32 %v943, %v1252
    %1254 = vmatpush1.msra.mxu0 %v1253
    %1255 = vmatprep.subr.mxu0 0.0
    %v1256 = vand.u32 %v942, 4294901760
    %v1257 = vsub.f32 %v942, %v1256
    %1258 = vmatpush1.msra.mxu0 %v1257
    %1259 = vmatprep.subr.mxu0 0.0
    %v1260 = vand.u32 %v941, 4294901760
    %v1261 = vsub.f32 %v941, %v1260
    %1262 = vmatpush1.msra.mxu0 %v1261
    %1263 = vmatprep.subr.mxu0 0.0
    %1264 = vmatpush2.msra.mxu0 0.0
    %1265 = vmatprep.subr.mxu0 0.0
    %1266 = vmatpush2.msra.mxu0 0.0
    %1267 = vmatprep.subr.mxu0 0.0
    %1268 = vmatpush2.msra.mxu0 0.0
    %1269 = vmatprep.subr.mxu0 0.0
    %1270 = vmatpush2.msra.mxu0 0.0
    %1271 = vmatprep.subr.mxu0 0.0
    %1272 = vmatpush2.msra.mxu0 0.0
    %1273 = vmatprep.subr.mxu0 0.0
    %1274 = vmatpush2.msra.mxu0 0.0
    %1275 = vmatprep.subr.mxu0 0.0
    %1276 = vmatpush2.msra.mxu0 0.0
    %1277 = vmatprep.subr.mxu0 0.0
    %1278 = vmatpush2.msra.mxu0 0.0
    %1279 = vmatprep.subr.mxu0 0.0
    %1280 = vmatpush2.msra.mxu0 0.0
    %1281 = vmatprep.subr.mxu0 0.0
    %1282 = vmatpush2.msra.mxu0 0.0
    %1283 = vmatprep.subr.mxu0 0.0
    %1284 = vmatpush2.msra.mxu0 0.0
    %1285 = vmatprep.subr.mxu0 0.0
    %1286 = vmatpush2.msra.mxu0 0.0
    %1287 = vmatprep.subr.mxu0 0.0
    %1288 = vmatpush2.msra.mxu0 0.0
    %1289 = vmatprep.subr.mxu0 0.0
    %1290 = vmatpush2.msra.mxu0 0.0
    %1291 = vmatprep.subr.mxu0 0.0
    %1292 = vmatpush2.msra.mxu0 0.0
    %1293 = vmatprep.subr.mxu0 0.0
    %1294 = vmatpush2.msra.mxu0 0.0
    %1295 = vmatprep.mubr.f32.mxu0 0.0
    %v1296 = vand.u32 %v940, 4294901760
    %v1297 = vsub.f32 %v940, %v1296
    %1298 = vmatmul.mubr.f32.gmra.mxu0 %v1297
    %v1299 = vpop.f32.mrf.mxu0
    %v1300 = vadd.f32 %v1196, %v1299
    %v1301 = vpop.f32.mrf.mxu0
    %1302 = vdwg.mxu0
    %1303 = vmatprep.subr.mxu0 0.0
    %v1304 = vand.u32 %v956, 4294901760
    %1305 = vmatpush1.msra.mxu0 %v1304
    %1306 = vmatprep.subr.mxu0 0.0
    %v1307 = vand.u32 %v955, 4294901760
    %1308 = vmatpush1.msra.mxu0 %v1307
    %1309 = vmatprep.subr.mxu0 0.0
    %v1310 = vand.u32 %v954, 4294901760
    %1311 = vmatpush1.msra.mxu0 %v1310
    %1312 = vmatprep.subr.mxu0 0.0
    %v1313 = vand.u32 %v953, 4294901760
    %1314 = vmatpush1.msra.mxu0 %v1313
    %1315 = vmatprep.subr.mxu0 0.0
    %v1316 = vand.u32 %v952, 4294901760
    %1317 = vmatpush1.msra.mxu0 %v1316
    %1318 = vmatprep.subr.mxu0 0.0
    %v1319 = vand.u32 %v951, 4294901760
    %1320 = vmatpush1.msra.mxu0 %v1319
    %1321 = vmatprep.subr.mxu0 0.0
    %v1322 = vand.u32 %v950, 4294901760
    %1323 = vmatpush1.msra.mxu0 %v1322
    %1324 = vmatprep.subr.mxu0 0.0
    %v1325 = vand.u32 %v949, 4294901760
    %1326 = vmatpush1.msra.mxu0 %v1325
    %1327 = vmatprep.subr.mxu0 0.0
    %v1328 = vand.u32 %v948, 4294901760
    %1329 = vmatpush1.msra.mxu0 %v1328
    %1330 = vmatprep.subr.mxu0 0.0
    %v1331 = vand.u32 %v947, 4294901760
    %1332 = vmatpush1.msra.mxu0 %v1331
    %1333 = vmatprep.subr.mxu0 0.0
    %v1334 = vand.u32 %v946, 4294901760
    %1335 = vmatpush1.msra.mxu0 %v1334
    %1336 = vmatprep.subr.mxu0 0.0
    %v1337 = vand.u32 %v945, 4294901760
    %1338 = vmatpush1.msra.mxu0 %v1337
    %1339 = vmatprep.subr.mxu0 0.0
    %v1340 = vand.u32 %v944, 4294901760
    %1341 = vmatpush1.msra.mxu0 %v1340
    %1342 = vmatprep.subr.mxu0 0.0
    %v1343 = vand.u32 %v943, 4294901760
    %1344 = vmatpush1.msra.mxu0 %v1343
    %1345 = vmatprep.subr.mxu0 0.0
    %v1346 = vand.u32 %v942, 4294901760
    %1347 = vmatpush1.msra.mxu0 %v1346
    %1348 = vmatprep.subr.mxu0 0.0
    %v1349 = vand.u32 %v941, 4294901760
    %1350 = vmatpush1.msra.mxu0 %v1349
    %1351 = vmatprep.subr.mxu0 0.0
    %1352 = vmatpush2.msra.mxu0 0.0
    %1353 = vmatprep.subr.mxu0 0.0
    %1354 = vmatpush2.msra.mxu0 0.0
    %1355 = vmatprep.subr.mxu0 0.0
    %1356 = vmatpush2.msra.mxu0 0.0
    %1357 = vmatprep.subr.mxu0 0.0
    %1358 = vmatpush2.msra.mxu0 0.0
    %1359 = vmatprep.subr.mxu0 0.0
    %1360 = vmatpush2.msra.mxu0 0.0
    %1361 = vmatprep.subr.mxu0 0.0
    %1362 = vmatpush2.msra.mxu0 0.0
    %1363 = vmatprep.subr.mxu0 0.0
    %1364 = vmatpush2.msra.mxu0 0.0
    %1365 = vmatprep.subr.mxu0 0.0
    %1366 = vmatpush2.msra.mxu0 0.0
    %1367 = vmatprep.subr.mxu0 0.0
    %1368 = vmatpush2.msra.mxu0 0.0
    %1369 = vmatprep.subr.mxu0 0.0
    %1370 = vmatpush2.msra.mxu0 0.0
    %1371 = vmatprep.subr.mxu0 0.0
    %1372 = vmatpush2.msra.mxu0 0.0
    %1373 = vmatprep.subr.mxu0 0.0
    %1374 = vmatpush2.msra.mxu0 0.0
    %1375 = vmatprep.subr.mxu0 0.0
    %1376 = vmatpush2.msra.mxu0 0.0
    %1377 = vmatprep.subr.mxu0 0.0
    %1378 = vmatpush2.msra.mxu0 0.0
    %1379 = vmatprep.subr.mxu0 0.0
    %1380 = vmatpush2.msra.mxu0 0.0
    %1381 = vmatprep.subr.mxu0 0.0
    %1382 = vmatpush2.msra.mxu0 0.0
    %1383 = vmatprep.mubr.f32.mxu0 0.0
    %v1384 = vand.u32 %v940, 4294901760
    %v1385 = vsub.f32 %v940, %v1384
    %v1386 = vand.u32 %v1385, 4294901760
    %1387 = vmatmul.mubr.f32.gmra.mxu0 %v1386
    %v1388 = vpop.f32.mrf.mxu0
    %v1389 = vadd.f32 %v1300, %v1388
    %v1390 = vpop.f32.mrf.mxu0
    %1391 = vdwg.mxu0
    %1392 = vmatprep.subr.mxu0 0.0
    %v1393 = vand.u32 %v956, 4294901760
    %v1394 = vsub.f32 %v956, %v1393
    %v1395 = vand.u32 %v1394, 4294901760
    %1396 = vmatpush1.msra.mxu0 %v1395
    %1397 = vmatprep.subr.mxu0 0.0
    %v1398 = vand.u32 %v955, 4294901760
    %v1399 = vsub.f32 %v955, %v1398
    %v1400 = vand.u32 %v1399, 4294901760
    %1401 = vmatpush1.msra.mxu0 %v1400
    %1402 = vmatprep.subr.mxu0 0.0
    %v1403 = vand.u32 %v954, 4294901760
    %v1404 = vsub.f32 %v954, %v1403
    %v1405 = vand.u32 %v1404, 4294901760
    %1406 = vmatpush1.msra.mxu0 %v1405
    %1407 = vmatprep.subr.mxu0 0.0
    %v1408 = vand.u32 %v953, 4294901760
    %v1409 = vsub.f32 %v953, %v1408
    %v1410 = vand.u32 %v1409, 4294901760
    %1411 = vmatpush1.msra.mxu0 %v1410
    %1412 = vmatprep.subr.mxu0 0.0
    %v1413 = vand.u32 %v952, 4294901760
    %v1414 = vsub.f32 %v952, %v1413
    %v1415 = vand.u32 %v1414, 4294901760
    %1416 = vmatpush1.msra.mxu0 %v1415
    %1417 = vmatprep.subr.mxu0 0.0
    %v1418 = vand.u32 %v951, 4294901760
    %v1419 = vsub.f32 %v951, %v1418
    %v1420 = vand.u32 %v1419, 4294901760
    %1421 = vmatpush1.msra.mxu0 %v1420
    %1422 = vmatprep.subr.mxu0 0.0
    %v1423 = vand.u32 %v950, 4294901760
    %v1424 = vsub.f32 %v950, %v1423
    %v1425 = vand.u32 %v1424, 4294901760
    %1426 = vmatpush1.msra.mxu0 %v1425
    %1427 = vmatprep.subr.mxu0 0.0
    %v1428 = vand.u32 %v949, 4294901760
    %v1429 = vsub.f32 %v949, %v1428
    %v1430 = vand.u32 %v1429, 4294901760
    %1431 = vmatpush1.msra.mxu0 %v1430
    %1432 = vmatprep.subr.mxu0 0.0
    %v1433 = vand.u32 %v948, 4294901760
    %v1434 = vsub.f32 %v948, %v1433
    %v1435 = vand.u32 %v1434, 4294901760
    %1436 = vmatpush1.msra.mxu0 %v1435
    %1437 = vmatprep.subr.mxu0 0.0
    %v1438 = vand.u32 %v947, 4294901760
    %v1439 = vsub.f32 %v947, %v1438
    %v1440 = vand.u32 %v1439, 4294901760
    %1441 = vmatpush1.msra.mxu0 %v1440
    %1442 = vmatprep.subr.mxu0 0.0
    %v1443 = vand.u32 %v946, 4294901760
    %v1444 = vsub.f32 %v946, %v1443
    %v1445 = vand.u32 %v1444, 4294901760
    %1446 = vmatpush1.msra.mxu0 %v1445
    %1447 = vmatprep.subr.mxu0 0.0
    %v1448 = vand.u32 %v945, 4294901760
    %v1449 = vsub.f32 %v945, %v1448
    %v1450 = vand.u32 %v1449, 4294901760
    %1451 = vmatpush1.msra.mxu0 %v1450
    %1452 = vmatprep.subr.mxu0 0.0
    %v1453 = vand.u32 %v944, 4294901760
    %v1454 = vsub.f32 %v944, %v1453
    %v1455 = vand.u32 %v1454, 4294901760
    %1456 = vmatpush1.msra.mxu0 %v1455
    %1457 = vmatprep.subr.mxu0 0.0
    %v1458 = vand.u32 %v943, 4294901760
    %v1459 = vsub.f32 %v943, %v1458
    %v1460 = vand.u32 %v1459, 4294901760
    %1461 = vmatpush1.msra.mxu0 %v1460
    %1462 = vmatprep.subr.mxu0 0.0
    %v1463 = vand.u32 %v942, 4294901760
    %v1464 = vsub.f32 %v942, %v1463
    %v1465 = vand.u32 %v1464, 4294901760
    %1466 = vmatpush1.msra.mxu0 %v1465
    %1467 = vmatprep.subr.mxu0 0.0
    %v1468 = vand.u32 %v941, 4294901760
    %v1469 = vsub.f32 %v941, %v1468
    %v1470 = vand.u32 %v1469, 4294901760
    %1471 = vmatpush1.msra.mxu0 %v1470
    %1472 = vmatprep.subr.mxu0 0.0
    %1473 = vmatpush2.msra.mxu0 0.0
    %1474 = vmatprep.subr.mxu0 0.0
    %1475 = vmatpush2.msra.mxu0 0.0
    %1476 = vmatprep.subr.mxu0 0.0
    %1477 = vmatpush2.msra.mxu0 0.0
    %1478 = vmatprep.subr.mxu0 0.0
    %1479 = vmatpush2.msra.mxu0 0.0
    %1480 = vmatprep.subr.mxu0 0.0
    %1481 = vmatpush2.msra.mxu0 0.0
    %1482 = vmatprep.subr.mxu0 0.0
    %1483 = vmatpush2.msra.mxu0 0.0
    %1484 = vmatprep.subr.mxu0 0.0
    %1485 = vmatpush2.msra.mxu0 0.0
    %1486 = vmatprep.subr.mxu0 0.0
    %1487 = vmatpush2.msra.mxu0 0.0
    %1488 = vmatprep.subr.mxu0 0.0
    %1489 = vmatpush2.msra.mxu0 0.0
    %1490 = vmatprep.subr.mxu0 0.0
    %1491 = vmatpush2.msra.mxu0 0.0
    %1492 = vmatprep.subr.mxu0 0.0
    %1493 = vmatpush2.msra.mxu0 0.0
    %1494 = vmatprep.subr.mxu0 0.0
    %1495 = vmatpush2.msra.mxu0 0.0
    %1496 = vmatprep.subr.mxu0 0.0
    %1497 = vmatpush2.msra.mxu0 0.0
    %1498 = vmatprep.subr.mxu0 0.0
    %1499 = vmatpush2.msra.mxu0 0.0
    %1500 = vmatprep.subr.mxu0 0.0
    %1501 = vmatpush2.msra.mxu0 0.0
    %1502 = vmatprep.subr.mxu0 0.0
    %1503 = vmatpush2.msra.mxu0 0.0
    %1504 = vmatprep.mubr.f32.mxu0 0.0
    %v1505 = vand.u32 %v940, 4294901760
    %1506 = vmatmul.mubr.f32.gmra.mxu0 %v1505
    %v1507 = vpop.f32.mrf.mxu0
    %v1508 = vadd.f32 %v1389, %v1507
    %v1509 = vpop.f32.mrf.mxu0
    %1510 = vdwg.mxu0
    %1511 = vmatprep.subr.mxu0 0.0
    %v1512 = vand.u32 %v956, 4294901760
    %1513 = vmatpush1.msra.mxu0 %v1512
    %1514 = vmatprep.subr.mxu0 0.0
    %v1515 = vand.u32 %v955, 4294901760
    %1516 = vmatpush1.msra.mxu0 %v1515
    %1517 = vmatprep.subr.mxu0 0.0
    %v1518 = vand.u32 %v954, 4294901760
    %1519 = vmatpush1.msra.mxu0 %v1518
    %1520 = vmatprep.subr.mxu0 0.0
    %v1521 = vand.u32 %v953, 4294901760
    %1522 = vmatpush1.msra.mxu0 %v1521
    %1523 = vmatprep.subr.mxu0 0.0
    %v1524 = vand.u32 %v952, 4294901760
    %1525 = vmatpush1.msra.mxu0 %v1524
    %1526 = vmatprep.subr.mxu0 0.0
    %v1527 = vand.u32 %v951, 4294901760
    %1528 = vmatpush1.msra.mxu0 %v1527
    %1529 = vmatprep.subr.mxu0 0.0
    %v1530 = vand.u32 %v950, 4294901760
    %1531 = vmatpush1.msra.mxu0 %v1530
    %1532 = vmatprep.subr.mxu0 0.0
    %v1533 = vand.u32 %v949, 4294901760
    %1534 = vmatpush1.msra.mxu0 %v1533
    %1535 = vmatprep.subr.mxu0 0.0
    %v1536 = vand.u32 %v948, 4294901760
    %1537 = vmatpush1.msra.mxu0 %v1536
    %1538 = vmatprep.subr.mxu0 0.0
    %v1539 = vand.u32 %v947, 4294901760
    %1540 = vmatpush1.msra.mxu0 %v1539
    %1541 = vmatprep.subr.mxu0 0.0
    %v1542 = vand.u32 %v946, 4294901760
    %1543 = vmatpush1.msra.mxu0 %v1542
    %1544 = vmatprep.subr.mxu0 0.0
    %v1545 = vand.u32 %v945, 4294901760
    %1546 = vmatpush1.msra.mxu0 %v1545
    %1547 = vmatprep.subr.mxu0 0.0
    %v1548 = vand.u32 %v944, 4294901760
    %1549 = vmatpush1.msra.mxu0 %v1548
    %1550 = vmatprep.subr.mxu0 0.0
    %v1551 = vand.u32 %v943, 4294901760
    %1552 = vmatpush1.msra.mxu0 %v1551
    %1553 = vmatprep.subr.mxu0 0.0
    %v1554 = vand.u32 %v942, 4294901760
    %1555 = vmatpush1.msra.mxu0 %v1554
    %1556 = vmatprep.subr.mxu0 0.0
    %v1557 = vand.u32 %v941, 4294901760
    %1558 = vmatpush1.msra.mxu0 %v1557
    %1559 = vmatprep.subr.mxu0 0.0
    %1560 = vmatpush2.msra.mxu0 0.0
    %1561 = vmatprep.subr.mxu0 0.0
    %1562 = vmatpush2.msra.mxu0 0.0
    %1563 = vmatprep.subr.mxu0 0.0
    %1564 = vmatpush2.msra.mxu0 0.0
    %1565 = vmatprep.subr.mxu0 0.0
    %1566 = vmatpush2.msra.mxu0 0.0
    %1567 = vmatprep.subr.mxu0 0.0
    %1568 = vmatpush2.msra.mxu0 0.0
    %1569 = vmatprep.subr.mxu0 0.0
    %1570 = vmatpush2.msra.mxu0 0.0
    %1571 = vmatprep.subr.mxu0 0.0
    %1572 = vmatpush2.msra.mxu0 0.0
    %1573 = vmatprep.subr.mxu0 0.0
    %1574 = vmatpush2.msra.mxu0 0.0
    %1575 = vmatprep.subr.mxu0 0.0
    %1576 = vmatpush2.msra.mxu0 0.0
    %1577 = vmatprep.subr.mxu0 0.0
    %1578 = vmatpush2.msra.mxu0 0.0
    %1579 = vmatprep.subr.mxu0 0.0
    %1580 = vmatpush2.msra.mxu0 0.0
    %1581 = vmatprep.subr.mxu0 0.0
    %1582 = vmatpush2.msra.mxu0 0.0
    %1583 = vmatprep.subr.mxu0 0.0
    %1584 = vmatpush2.msra.mxu0 0.0
    %1585 = vmatprep.subr.mxu0 0.0
    %1586 = vmatpush2.msra.mxu0 0.0
    %1587 = vmatprep.subr.mxu0 0.0
    %1588 = vmatpush2.msra.mxu0 0.0
    %1589 = vmatprep.subr.mxu0 0.0
    %1590 = vmatpush2.msra.mxu0 0.0
    %1591 = vmatprep.mubr.f32.mxu0 0.0
    %v1592 = vand.u32 %v940, 4294901760
    %1593 = vmatmul.mubr.f32.gmra.mxu0 %v1592
    %v1594 = vpop.f32.mrf.mxu0
    %v1595 = vadd.f32 %v1508, %v1594
    %v1596 = vpop.f32.mrf.mxu0
    %1597 = vdwg.mxu0
    %1599 = vset.pattern.permute.xlu0 127
    %1600 = vperm.xlu0 %1599, %v744
    %v1601 = vpop.permute.xlu0 %1600
    %v1603 = vadd.f32 %v1601, %v1595
    %v1604 = vld [vmem:[#allocation5 + $0x8] sm:$0xff]
    %v1605 = vadd.f32 %v1603, %v1604
    %v1606 = vadd.f32 %v1605, 0.5
    %v1607 = vfloor.f32 %v1606
    %v1608 = vsub.f32 %v1605, %v1607
    %v1609 = vmul.f32 %v1608, %v1608
    %v1610 = vmul.f32 %v1609, -0.007370431
    %v1611 = vadd.f32 %v1610, 0.082145885
    %v1612 = vmul.f32 %v1611, %v1609
    %v1613 = vadd.f32 %v1612, -0.5992645
    %v1614 = vmul.f32 %v1613, %v1609
    %v1615 = vadd.f32 %v1614, 2.550164
    %v1616 = vmul.f32 %v1615, %v1609
    %v1617 = vadd.f32 %v1616, -5.1677127
    %v1618 = vmul.f32 %v1617, %v1609
    %v1619 = vadd.f32 %v1618, 3.1415927
    %v1620 = vmul.f32 %v1608, %v1619
    %v1621 = vmul.f32 %v1609, 0.0019295743
    %v1622 = vadd.f32 %v1621, -0.02580689
    %v1623 = vmul.f32 %v1622, %v1609
    %v1624 = vadd.f32 %v1623, 0.23533063
    %v1625 = vmul.f32 %v1624, %v1609
    %v1626 = vadd.f32 %v1625, -1.3352628
    %v1627 = vmul.f32 %v1626, %v1609
    %v1628 = vadd.f32 %v1627, 4.058712
    %v1629 = vmul.f32 %v1628, %v1609
    %v1630 = vadd.f32 %v1629, -4.934802
    %v1631 = vmul.f32 %v1630, %v1609
    %v1632 = vadd.f32 %v1631, 1.0
    %v1633 = vmul.f32 %v1620, 2.0
    %v1634 = vmul.f32 %v1633, %v1632
    %v1635 = vmul.f32 %v1633, %v1620
    %v1636 = vsub.f32 1.0, %v1635
    %vm1637 = vcmp.ge.f32.partialorder %v940, 0.5
    %v1638 = vsel %vm1637, 0.0, 1.0
    %v1639 = vmul.f32 %v1634, %v781
    %v1640 = vmul.f32 %v1636, %v787
    %v1641 = vadd.f32 %v1639, %v1640
    %v1642 = vmul.f32 %v1641, %v1638
    %v1643 = vadd.f32 %v1642, 0.0
    %v1644 = vmul.f32 %v1634, %v1636
    %v1645 = vadd.f32 %v1644, %v1644
    %v1646 = vmul.f32 %v1636, %v1636
    %v1647 = vmul.f32 %v1634, %v1634
    %v1648 = vsub.f32 %v1646, %v1647
    %vm1649 = vcmp.ge.f32.partialorder %v940, 0.25
    %v1650 = vsel %vm1649, 0.0, 0.5
    %v1651 = vmul.f32 %v1645, %v802
    %v1652 = vmul.f32 %v1648, %v807
    %v1653 = vadd.f32 %v1651, %v1652
    %v1654 = vmul.f32 %v1653, %v1650
    %v1655 = vadd.f32 %v1643, %v1654
    %v1656 = vmul.f32 %v1645, %v1636
    %v1657 = vmul.f32 %v1648, %v1634
    %v1658 = vadd.f32 %v1656, %v1657
    %v1659 = vmul.f32 %v1648, %v1636
    %v1660 = vmul.f32 %v1645, %v1634
    %v1661 = vsub.f32 %v1659, %v1660
    %vm1662 = vcmp.ge.f32.partialorder %v940, 0.16666667
    %v1663 = vsel %vm1662, 0.0, 0.33333334
    %v1664 = vmul.f32 %v1658, %v823
    %v1665 = vmul.f32 %v1661, %v828
    %v1666 = vadd.f32 %v1664, %v1665
    %v1667 = vmul.f32 %v1666, %v1663
    %v1668 = vadd.f32 %v1655, %v1667
    %v1669 = vmul.f32 %v1658, %v1636
    %v1670 = vmul.f32 %v1661, %v1634
    %v1671 = vadd.f32 %v1669, %v1670
    %v1672 = vmul.f32 %v1661, %v1636
    %v1673 = vmul.f32 %v1658, %v1634
    %v1674 = vsub.f32 %v1672, %v1673
    %vm1675 = vcmp.ge.f32.partialorder %v940, 0.125
    %v1676 = vsel %vm1675, 0.0, 0.25
    %v1677 = vmul.f32 %v1671, %v844
    %v1678 = vmul.f32 %v1674, %v849
    %v1679 = vadd.f32 %v1677, %v1678
    %v1680 = vmul.f32 %v1679, %v1676
    %v1681 = vadd.f32 %v1668, %v1680
    %v1682 = vmul.f32 %v1671, %v1636
    %v1683 = vmul.f32 %v1674, %v1634
    %v1684 = vadd.f32 %v1682, %v1683
    %v1685 = vmul.f32 %v1674, %v1636
    %v1686 = vmul.f32 %v1671, %v1634
    %v1687 = vsub.f32 %v1685, %v1686
    %vm1688 = vcmp.ge.f32.partialorder %v940, 0.1
    %v1689 = vsel %vm1688, 0.0, 0.2
    %v1690 = vmul.f32 %v1684, %v865
    %v1691 = vmul.f32 %v1687, %v870
    %v1692 = vadd.f32 %v1690, %v1691
    %v1693 = vmul.f32 %v1692, %v1689
    %v1694 = vadd.f32 %v1681, %v1693
    %v1695 = vmul.f32 %v1684, %v1636
    %v1696 = vmul.f32 %v1687, %v1634
    %v1697 = vadd.f32 %v1695, %v1696
    %v1698 = vmul.f32 %v1687, %v1636
    %v1699 = vmul.f32 %v1684, %v1634
    %v1700 = vsub.f32 %v1698, %v1699
    %vm1701 = vcmp.ge.f32.partialorder %v940, 0.083333336
    %v1702 = vsel %vm1701, 0.0, 0.16666667
    %v1703 = vmul.f32 %v1697, %v886
    %v1704 = vmul.f32 %v1700, %v891
    %v1705 = vadd.f32 %v1703, %v1704
    %v1706 = vmul.f32 %v1705, %v1702
    %v1707 = vadd.f32 %v1694, %v1706
    %v1708 = vmul.f32 %v1697, %v1636
    %v1709 = vmul.f32 %v1700, %v1634
    %v1710 = vadd.f32 %v1708, %v1709
    %v1711 = vmul.f32 %v1700, %v1636
    %v1712 = vmul.f32 %v1697, %v1634
    %v1713 = vsub.f32 %v1711, %v1712
    %vm1714 = vcmp.ge.f32.partialorder %v940, 0.071428575
    %v1715 = vsel %vm1714, 0.0, 0.14285715
    %v1716 = vmul.f32 %v1710, %v907
    %v1717 = vmul.f32 %v1713, %v912
    %v1718 = vadd.f32 %v1716, %v1717
    %v1719 = vmul.f32 %v1718, %v1715
    %v1720 = vadd.f32 %v1707, %v1719
    %v1721 = vmul.f32 %v1710, %v1636
    %v1722 = vmul.f32 %v1713, %v1634
    %v1723 = vadd.f32 %v1721, %v1722
    %v1724 = vmul.f32 %v1713, %v1636
    %v1725 = vmul.f32 %v1710, %v1634
    %v1726 = vsub.f32 %v1724, %v1725
    %vm1727 = vcmp.ge.f32.partialorder %v940, 0.0625
    %v1728 = vsel %vm1727, 0.0, 0.125
    %v1729 = vmul.f32 %v1723, %v928
    %v1730 = vmul.f32 %v1726, %v933
    %v1731 = vadd.f32 %v1729, %v1730
    %v1732 = vmul.f32 %v1731, %v1728
    %v1733 = vadd.f32 %v1720, %v1732
    %1734 = vst [vmem:[#allocation11 + $0x8] sm:$0xff] %v1733
    // Predicated region
    $region42: #{tpu_custom_call.1} parent=1 // pred_check
      _
    $region43: #{tpu_custom_call.1} parent=1 // pred_check_branch
      %1736 = sbr.rel (0) target = $region45
    $region44: #{tpu_custom_call.1} parent=1 // pred_region
      %s1738 = ssub.s32 256, 256
      %1739 = vsyncadd [#allocation4], %s1738
      %s1741 = sshll.u32 [#allocation11], 4
      %s1742 = int_to_ptr.vmem [resolvable:$true] %s1741
      %1744 = dma.vmem_to_hbm [thread:$0]  %s1742, 256, %s5, [#allocation4]
    $region45: #{tpu_custom_call.1} parent=1 // pred_fallthru
      _
    // Predicated region
    $region46: #{tpu_custom_call.1} parent=1 // pred_check
      _
    $region47: #{tpu_custom_call.1} parent=1 // pred_check_branch
      %1746 = sbr.rel (0) target = $region49
    $region48: #{tpu_custom_call.1} parent=1 // pred_region
      %1747 = dma.done [#allocation4], 256
    $region49: #{tpu_custom_call.1} parent=1 // pred_fallthru
      _
    %1748 = vsyncpa [#allocation3], 1
    %1749 = vsyncpa [#allocation6], 1
    %1750 = vsyncpa [#allocation9], 1
    %1751 = vsyncpa [#allocation4], 1

</llo_original>
